<compile_context>
chip_gen: v7x
topology: tpu7x:2x2x1
jax: 0.10.0
libtpu: 0.0.40
codegen_flags: <defaults>
</compile_context>

<pallas_src>
import functools

import jax
import jax.numpy as jnp
from jax import lax
from jax.experimental import pallas as pl
from jax.experimental.pallas import tpu as pltpu

EPS = 1e-5
LANE = 128


def _bn_act(h, gamma, beta, inv_m, neg_slope):
    """Training-mode BatchNorm1d (batch stats over axis 0) + (Leaky)ReLU, f32."""
    mean = jnp.sum(h, axis=0, keepdims=True) * inv_m
    ex2 = jnp.sum(h * h, axis=0, keepdims=True) * inv_m
    var = ex2 - mean * mean                       # biased variance, one pass
    scale = lax.rsqrt(var + EPS) * gamma          # gamma folded into inv_std
    shift = beta - mean * scale
    y = h * scale + shift
    return jnp.maximum(y, neg_slope * y)          # neg_slope=0.0 -> plain ReLU


def classifier_kernel(x_ref, w1_ref, g1_ref, b1_ref,
                      w2_ref, g2_ref, b2_ref,
                      w3_ref, bias3_ref, o_ref, *, neg_slope):
    # NOTE: inv_m is the full batch size only because there is no M tiling; if
    # B ever gets tiled this must become 1/total_B with cross-tile sum/sumsq.
    inv_m = 1.0 / x_ref.shape[0]

    # mlp1: Linear(1024->512) [linear bias cancelled by training-mode BN]
    # bf16 operands, f32 accumulation; BN + activation entirely in f32.
    h1 = jnp.dot(x_ref[...], w1_ref[...], preferred_element_type=jnp.float32)
    h1 = _bn_act(h1, g1_ref[...], b1_ref[...], inv_m, neg_slope)
    # TODO(synk): nn.Dropout(p=args.dropout) after mlp1/mlp2 is implemented as
    # identity (inference behaviour); a training-mode mask would need an RNG.

    # mlp2: Linear(512->256) + BN1d + act
    h2 = jnp.dot(h1.astype(w2_ref.dtype), w2_ref[...],
                 preferred_element_type=jnp.float32)
    h2 = _bn_act(h2, g2_ref[...], b2_ref[...], inv_m, neg_slope)

    # mlp3: plain Linear(256->num_class_padded); its bias is NOT BN-cancelled.
    logits = jnp.dot(h2.astype(w3_ref.dtype), w3_ref[...],
                     preferred_element_type=jnp.float32)
    o_ref[...] = (logits + bias3_ref[...]).astype(o_ref.dtype)


def prepare_params(w1, g1, beta1, w2, g2, beta2, w3, b3, *, lane=LANE):
    """One-off (parameter-load time) preparation — NOT per forward call:
      * transpose torch (out,in) Linear weights to (in,out) so kernel matmuls
        are (B,K)@(K,N) with the big output dims lane-dense,
      * cast the matmul weights to bf16 (halves the dominant HBM read; the
        kernel accumulates in f32 via preferred_element_type),
      * pad mlp3 weight/bias columns (num_class) up to a multiple of 128 so the
        final matmul and output store are unmasked full-lane,
      * keep BN gamma/beta and the mlp3 bias in f32 (post-matmul math is f32).
    """
    ncls = w3.shape[0]
    pad = (-ncls) % lane
    f32 = jnp.float32
    return dict(
        w1=jnp.asarray(w1.T, jnp.bfloat16),
        g1=g1.astype(f32).reshape(1, -1),
        beta1=beta1.astype(f32).reshape(1, -1),
        w2=jnp.asarray(w2.T, jnp.bfloat16),
        g2=g2.astype(f32).reshape(1, -1),
        beta2=beta2.astype(f32).reshape(1, -1),
        w3=jnp.pad(jnp.asarray(w3.T, jnp.bfloat16), ((0, 0), (0, pad))),
        b3=jnp.pad(b3.astype(f32), (0, pad)).reshape(1, -1),
        num_class=ncls,
    )


def classifier_forward(x, params, *, negative_slope=0.2):
    """classifier(args, num_class).forward(x) with dropout=identity.

    `params` must come from prepare_params() (done once, outside the hot path).
    x is cast to bf16 for the MXU; ideally the upstream op already emits bf16.
    """
    B = x.shape[0]
    ncls = params["num_class"]
    ncls_pad = params["w3"].shape[1]

    kernel = functools.partial(classifier_kernel, neg_slope=negative_slope)
    # No grid: single invocation, every operand a whole-array VMEM block
    # (~1.5 MiB total) -> no double-buffering, no pipeline overhead.
    vmem = pl.BlockSpec(memory_space=pltpu.MemorySpace.VMEM)

    out = pl.pallas_call(
        kernel,
        out_shape=jax.ShapeDtypeStruct((B, ncls_pad), jnp.float32),
        in_specs=[vmem] * 9,
        out_specs=vmem,
    )(x.astype(jnp.bfloat16),
      params["w1"], params["g1"], params["beta1"],
      params["w2"], params["g2"], params["beta2"],
      params["w3"], params["b3"])
    return out[:, :ncls]


def reference(x, w1, b1lin, g1, beta1, w2, b2lin, g2, beta2, w3, b3, neg_slope):
    """Pure-JAX f32/HIGHEST reference (keeps the mlp1/mlp2 linear biases to
    show they are exactly cancelled by training-mode BN)."""
    def fc_bn_act(h, w, b, g, beta):
        h = jnp.dot(h, w.T, precision=lax.Precision.HIGHEST) + b
        mean = h.mean(axis=0, keepdims=True)
        var = ((h - mean) ** 2).mean(axis=0, keepdims=True)   # biased
        y = (h - mean) / jnp.sqrt(var + EPS) * g + beta
        return jnp.where(y >= 0, y, neg_slope * y)

    h1 = fc_bn_act(x, w1, b1lin, g1, beta1)
    h2 = fc_bn_act(h1, w2, b2lin, g2, beta2)
    return jnp.dot(h2, w3.T, precision=lax.Precision.HIGHEST) + b3


if __name__ == "__main__":
    # classifier(args, num_class=10) with args.model == 'dgcnn'
    # -> LeakyReLU(0.2); dropout is identity at inference.
    B, D_IN, H1, H2, NCLS = 16, 1024, 512, 256, 10
    NEG_SLOPE = 0.2

    key = jax.random.PRNGKey(0)
    ks = jax.random.split(key, 11)
    x = jax.random.normal(ks[0], (B, D_IN), dtype=jnp.float32)
    # Deterministic synthetic parameter init (roughly PyTorch default scale).
    w1 = jax.random.normal(ks[1], (H1, D_IN), jnp.float32) * (1.0 / D_IN ** 0.5)
    b1lin = 0.1 * jax.random.normal(ks[2], (H1,), jnp.float32)
    g1 = 1.0 + 0.1 * jax.random.normal(ks[3], (H1,), jnp.float32)
    beta1 = 0.1 * jax.random.normal(ks[4], (H1,), jnp.float32)
    w2 = jax.random.normal(ks[5], (H2, H1), jnp.float32) * (1.0 / H1 ** 0.5)
    b2lin = 0.1 * jax.random.normal(ks[6], (H2,), jnp.float32)
    g2 = 1.0 + 0.1 * jax.random.normal(ks[7], (H2,), jnp.float32)
    beta2 = 0.1 * jax.random.normal(ks[8], (H2,), jnp.float32)
    w3 = jax.random.normal(ks[9], (NCLS, H2), jnp.float32) * (1.0 / H2 ** 0.5)
    b3 = 0.1 * jax.random.normal(ks[10], (NCLS,), jnp.float32)

    # One-off parameter preparation (transpose / bf16 cast / pad) — outside the
    # per-call hot path.
    params = prepare_params(w1, g1, beta1, w2, g2, beta2, w3, b3)

    out = classifier_forward(x, params, negative_slope=NEG_SLOPE)
    out = jax.block_until_ready(out)

    ref = reference(x, w1, b1lin, g1, beta1, w2, b2lin, g2, beta2, w3, b3,
                    NEG_SLOPE)
    assert out.shape == (B, NCLS)
    err = float(jnp.max(jnp.abs(out - ref)))
    # Tolerance deliberately widened for bf16 matmul operands (f32 accumulate).
    assert jnp.allclose(out, ref, atol=5e-2, rtol=5e-2), \
        f"mismatch vs f32 reference, max abs err {err}"

    print("KERNEL_OK")
</pallas_src>

<mosaic_0001>
module attributes {stable_mosaic.version = 11 : i64} {
  func.func @classifier_kernel(%arg0: memref<16x1024xbf16, #tpu.memory_space<vmem>>, %arg1: memref<1024x512xbf16, #tpu.memory_space<vmem>>, %arg2: memref<1x512xf32, #tpu.memory_space<vmem>>, %arg3: memref<1x512xf32, #tpu.memory_space<vmem>>, %arg4: memref<512x256xbf16, #tpu.memory_space<vmem>>, %arg5: memref<1x256xf32, #tpu.memory_space<vmem>>, %arg6: memref<1x256xf32, #tpu.memory_space<vmem>>, %arg7: memref<256x128xbf16, #tpu.memory_space<vmem>>, %arg8: memref<1x128xf32, #tpu.memory_space<vmem>>, %arg9: memref<16x128xf32, #tpu.memory_space<vmem>>) attributes {dimension_semantics = [], scalar_prefetch = 0 : i64, scratch_operands = 0 : i64, tpu.core_type = #tpu.core_type<tc>} {
    %c0 = arith.constant 0 : index
    %c0_0 = arith.constant 0 : index
    %0 = vector.load %arg0[%c0, %c0_0] : memref<16x1024xbf16, #tpu.memory_space<vmem>>, vector<16x1024xbf16>
    %c0_1 = arith.constant 0 : index
    %c0_2 = arith.constant 0 : index
    %1 = vector.load %arg1[%c0_1, %c0_2] : memref<1024x512xbf16, #tpu.memory_space<vmem>>, vector<1024x512xbf16>
    %cst = arith.constant dense<0.000000e+00> : vector<16x512xf32>
    %2 = tpu.matmul %0, %1, %cst {dimension_numbers = #tpu.dot_dimension_numbers<[1], [0], [0], [1], [0, 0, 1, 1], [], []>} : vector<16x1024xbf16>, vector<1024x512xbf16>, vector<16x512xf32> -> vector<16x512xf32>
    %c0_3 = arith.constant 0 : index
    %c0_4 = arith.constant 0 : index
    %3 = vector.load %arg2[%c0_3, %c0_4] : memref<1x512xf32, #tpu.memory_space<vmem>>, vector<1x512xf32>
    %c0_5 = arith.constant 0 : index
    %c0_6 = arith.constant 0 : index
    %4 = vector.load %arg3[%c0_5, %c0_6] : memref<1x512xf32, #tpu.memory_space<vmem>>, vector<1x512xf32>
    %cst_7 = arith.constant dense<0.000000e+00> : vector<512xf32>
    %5 = vector.multi_reduction <add>, %2, %cst_7 [0] : vector<16x512xf32> to vector<512xf32>
    %6 = vector.shape_cast %5 : vector<512xf32> to vector<1x512xf32>
    %cst_8 = arith.constant 6.250000e-02 : f32
    %7 = vector.broadcast %cst_8 : f32 to vector<1x512xf32>
    %8 = arith.mulf %6, %7 : vector<1x512xf32>
    %9 = arith.mulf %2, %2 : vector<16x512xf32>
    %cst_9 = arith.constant dense<0.000000e+00> : vector<512xf32>
    %10 = vector.multi_reduction <add>, %9, %cst_9 [0] : vector<16x512xf32> to vector<512xf32>
    %11 = vector.shape_cast %10 : vector<512xf32> to vector<1x512xf32>
    %cst_10 = arith.constant 6.250000e-02 : f32
    %12 = vector.broadcast %cst_10 : f32 to vector<1x512xf32>
    %13 = arith.mulf %11, %12 : vector<1x512xf32>
    %14 = arith.mulf %8, %8 : vector<1x512xf32>
    %15 = arith.subf %13, %14 : vector<1x512xf32>
    %cst_11 = arith.constant 9.99999974E-6 : f32
    %16 = vector.broadcast %cst_11 : f32 to vector<1x512xf32>
    %17 = arith.addf %15, %16 : vector<1x512xf32>
    %18 = math.rsqrt %17 : vector<1x512xf32>
    %19 = arith.mulf %18, %3 : vector<1x512xf32>
    %20 = arith.mulf %8, %19 : vector<1x512xf32>
    %21 = arith.subf %4, %20 : vector<1x512xf32>
    %22 = vector.broadcast %19 : vector<1x512xf32> to vector<16x512xf32>
    %23 = arith.mulf %2, %22 : vector<16x512xf32>
    %24 = vector.broadcast %21 : vector<1x512xf32> to vector<16x512xf32>
    %25 = arith.addf %23, %24 : vector<16x512xf32>
    %cst_12 = arith.constant 2.000000e-01 : f32
    %26 = vector.broadcast %cst_12 : f32 to vector<16x512xf32>
    %27 = arith.mulf %26, %25 : vector<16x512xf32>
    %28 = arith.maximumf %25, %27 : vector<16x512xf32>
    %29 = arith.truncf %28 : vector<16x512xf32> to vector<16x512xbf16>
    %c0_13 = arith.constant 0 : index
    %c0_14 = arith.constant 0 : index
    %30 = vector.load %arg4[%c0_13, %c0_14] : memref<512x256xbf16, #tpu.memory_space<vmem>>, vector<512x256xbf16>
    %cst_15 = arith.constant dense<0.000000e+00> : vector<16x256xf32>
    %31 = tpu.matmul %29, %30, %cst_15 {dimension_numbers = #tpu.dot_dimension_numbers<[1], [0], [0], [1], [0, 0, 1, 1], [], []>} : vector<16x512xbf16>, vector<512x256xbf16>, vector<16x256xf32> -> vector<16x256xf32>
    %c0_16 = arith.constant 0 : index
    %c0_17 = arith.constant 0 : index
    %32 = vector.load %arg5[%c0_16, %c0_17] : memref<1x256xf32, #tpu.memory_space<vmem>>, vector<1x256xf32>
    %c0_18 = arith.constant 0 : index
    %c0_19 = arith.constant 0 : index
    %33 = vector.load %arg6[%c0_18, %c0_19] : memref<1x256xf32, #tpu.memory_space<vmem>>, vector<1x256xf32>
    %cst_20 = arith.constant dense<0.000000e+00> : vector<256xf32>
    %34 = vector.multi_reduction <add>, %31, %cst_20 [0] : vector<16x256xf32> to vector<256xf32>
    %35 = vector.shape_cast %34 : vector<256xf32> to vector<1x256xf32>
    %cst_21 = arith.constant 6.250000e-02 : f32
    %36 = vector.broadcast %cst_21 : f32 to vector<1x256xf32>
    %37 = arith.mulf %35, %36 : vector<1x256xf32>
    %38 = arith.mulf %31, %31 : vector<16x256xf32>
    %cst_22 = arith.constant dense<0.000000e+00> : vector<256xf32>
    %39 = vector.multi_reduction <add>, %38, %cst_22 [0] : vector<16x256xf32> to vector<256xf32>
    %40 = vector.shape_cast %39 : vector<256xf32> to vector<1x256xf32>
    %cst_23 = arith.constant 6.250000e-02 : f32
    %41 = vector.broadcast %cst_23 : f32 to vector<1x256xf32>
    %42 = arith.mulf %40, %41 : vector<1x256xf32>
    %43 = arith.mulf %37, %37 : vector<1x256xf32>
    %44 = arith.subf %42, %43 : vector<1x256xf32>
    %cst_24 = arith.constant 9.99999974E-6 : f32
    %45 = vector.broadcast %cst_24 : f32 to vector<1x256xf32>
    %46 = arith.addf %44, %45 : vector<1x256xf32>
    %47 = math.rsqrt %46 : vector<1x256xf32>
    %48 = arith.mulf %47, %32 : vector<1x256xf32>
    %49 = arith.mulf %37, %48 : vector<1x256xf32>
    %50 = arith.subf %33, %49 : vector<1x256xf32>
    %51 = vector.broadcast %48 : vector<1x256xf32> to vector<16x256xf32>
    %52 = arith.mulf %31, %51 : vector<16x256xf32>
    %53 = vector.broadcast %50 : vector<1x256xf32> to vector<16x256xf32>
    %54 = arith.addf %52, %53 : vector<16x256xf32>
    %cst_25 = arith.constant 2.000000e-01 : f32
    %55 = vector.broadcast %cst_25 : f32 to vector<16x256xf32>
    %56 = arith.mulf %55, %54 : vector<16x256xf32>
    %57 = arith.maximumf %54, %56 : vector<16x256xf32>
    %58 = arith.truncf %57 : vector<16x256xf32> to vector<16x256xbf16>
    %c0_26 = arith.constant 0 : index
    %c0_27 = arith.constant 0 : index
    %59 = vector.load %arg7[%c0_26, %c0_27] : memref<256x128xbf16, #tpu.memory_space<vmem>>, vector<256x128xbf16>
    %cst_28 = arith.constant dense<0.000000e+00> : vector<16x128xf32>
    %60 = tpu.matmul %58, %59, %cst_28 {dimension_numbers = #tpu.dot_dimension_numbers<[1], [0], [0], [1], [0, 0, 1, 1], [], []>} : vector<16x256xbf16>, vector<256x128xbf16>, vector<16x128xf32> -> vector<16x128xf32>
    %c0_29 = arith.constant 0 : index
    %c0_30 = arith.constant 0 : index
    %61 = vector.load %arg8[%c0_29, %c0_30] : memref<1x128xf32, #tpu.memory_space<vmem>>, vector<1x128xf32>
    %62 = vector.broadcast %61 : vector<1x128xf32> to vector<16x128xf32>
    %63 = arith.addf %60, %62 : vector<16x128xf32>
    %c0_31 = arith.constant 0 : index
    %c0_32 = arith.constant 0 : index
    %64 = vector.load %arg9[%c0_31, %c0_32] : memref<16x128xf32, #tpu.memory_space<vmem>>, vector<16x128xf32>
    tpu.vector_store %arg9[%c0_31, %c0_32], %63 {strides = array<i32>} : memref<16x128xf32, #tpu.memory_space<vmem>>, vector<16x128xf32>,
    return
  }
}

</mosaic_0001>

<llo_original>
// kernel: tpu_custom_call.1
$region0: #{tpu_custom_call.1}
  #allocation0 [shape = 'u32[]', space=smem, size = 0x4, offset = 0x4, fixed_abs, tag = 'smem constant byte address 0x4 - core index']
  #allocation1 [shape = 'u32[144,128]{1,0:T(1,128)}', space=vmem, size = 0x12000, scoped, tag = 'internal scratch']
  %s0 = inlined_call_operand.hbm [shape: bf16[16,1024], index: 0, kind: input, shape index: {}]
  %s1 = inlined_call_operand.hbm [shape: bf16[1024,512], index: 1, kind: input, shape index: {}]
  %s2 = inlined_call_operand.vmem [shape: f32[1,512], index: 2, kind: input, shape index: {}]
  %s3 = inlined_call_operand.vmem [shape: f32[1,512], index: 3, kind: input, shape index: {}]
  %s4 = inlined_call_operand.hbm [shape: bf16[512,256], index: 4, kind: input, shape index: {}]
  %s5 = inlined_call_operand.vmem [shape: f32[1,256], index: 5, kind: input, shape index: {}]
  %s6 = inlined_call_operand.vmem [shape: f32[1,256], index: 6, kind: input, shape index: {}]
  %s7 = inlined_call_operand.hbm [shape: bf16[256,128], index: 7, kind: input, shape index: {}]
  %s8 = inlined_call_operand.vmem [shape: f32[1,128], index: 8, kind: input, shape index: {}]
  %s9 = inlined_call_operand.hbm [shape: f32[16,128], index: 9, kind: output, shape index: {}]
  %s10 = sld [smem:[#allocation0]]
  $region62: #{tpu_custom_call.1} parent=0
    _
  %s12 = ssub.s32 1, %s10
  %s13 = scalar_select 0, %s12, %s10
  $region1: #{tpu_custom_call.1} parent=0
    #allocation2 [shape = 'u8[32768]{0}', space=vmem, size = 0x8000, scoped, tag = 'input window, operand 0, single buffered']
    #allocation3 [shape = 's32[1]{0}', space=sflag, size = 0x4, scoped, tag = 'scoped memory for tpu_custom_call.1']
    #allocation4 [shape = 's32[1]{0}', space=sflag, size = 0x4, scoped, tag = 'scoped memory for tpu_custom_call.1']
    #allocation5 [shape = 'u8[1048576]{0}', space=vmem, size = 0x100000, scoped, tag = 'input window, operand 1, single buffered']
    #allocation6 [shape = 's32[1]{0}', space=sflag, size = 0x4, scoped, tag = 'scoped memory for tpu_custom_call.1']
    #allocation7 [shape = 'u8[262144]{0}', space=vmem, size = 0x40000, scoped, tag = 'input window, operand 4, single buffered']
    #allocation8 [shape = 'u8[65536]{0}', space=vmem, size = 0x10000, scoped, tag = 'input window, operand 7, single buffered']
    #allocation9 [shape = 's32[1]{0}', space=sflag, size = 0x4, scoped, tag = 'scoped memory for tpu_custom_call.1']
    #allocation10 [shape = 'u8[8192]{0}', space=vmem, size = 0x2000, scoped, tag = 'output window, operand 0, single buffered']
    %14 = vsyncpa [#allocation3], 0
    %15 = vsyncpa [#allocation6], 0
    %16 = vsyncpa [#allocation9], 0
    %17 = vsyncpa [#allocation4], 0
    // Predicated region
    $region2: #{tpu_custom_call.1} parent=1 // pred_check
      _
    $region3: #{tpu_custom_call.1} parent=1 // pred_check_branch
      %19 = sbr.rel (0) target = $region5
    $region4: #{tpu_custom_call.1} parent=1 // pred_region
      %s21 = ssub.s32 1024, 1024
      %22 = vsyncadd [#allocation3], %s21
      %s23 = sshll.u32 [#allocation2], 4
      %s24 = int_to_ptr.vmem [resolvable:$true] %s23
      %29 = dma.hbm_to_vmem [thread:$0]  %s0, 1024, %s24, [#allocation3], 512, 512, 32
    $region5: #{tpu_custom_call.1} parent=1 // pred_fallthru
      _
    // Predicated region
    $region6: #{tpu_custom_call.1} parent=1 // pred_check
      _
    $region7: #{tpu_custom_call.1} parent=1 // pred_check_branch
      %31 = sbr.rel (0) target = $region9
    $region8: #{tpu_custom_call.1} parent=1 // pred_region
      %s33 = ssub.s32 32768, 32768
      %34 = vsyncadd [#allocation6], %s33
      %s35 = sshll.u32 [#allocation5], 4
      %s36 = int_to_ptr.vmem [resolvable:$true] %s35
      %41 = dma.hbm_to_vmem [thread:$0]  %s1, 32768, %s36, [#allocation6], 256, 256, 16
    $region9: #{tpu_custom_call.1} parent=1 // pred_fallthru
      _
    // Predicated region
    $region10: #{tpu_custom_call.1} parent=1 // pred_check
      _
    $region11: #{tpu_custom_call.1} parent=1 // pred_check_branch
      %43 = sbr.rel (0) target = $region13
    $region12: #{tpu_custom_call.1} parent=1 // pred_region
      _
    $region13: #{tpu_custom_call.1} parent=1 // pred_fallthru
      _
    // Predicated region
    $region14: #{tpu_custom_call.1} parent=1 // pred_check
      _
    $region15: #{tpu_custom_call.1} parent=1 // pred_check_branch
      %45 = sbr.rel (0) target = $region17
    $region16: #{tpu_custom_call.1} parent=1 // pred_region
      _
    $region17: #{tpu_custom_call.1} parent=1 // pred_fallthru
      _
    // Predicated region
    $region18: #{tpu_custom_call.1} parent=1 // pred_check
      _
    $region19: #{tpu_custom_call.1} parent=1 // pred_check_branch
      %47 = sbr.rel (0) target = $region21
    $region20: #{tpu_custom_call.1} parent=1 // pred_region
      %s49 = ssub.s32 8192, 8192
      %50 = vsyncadd [#allocation6], %s49
      %s51 = sshll.u32 [#allocation7], 4
      %s52 = int_to_ptr.vmem [resolvable:$true] %s51
      %57 = dma.hbm_to_vmem [thread:$0]  %s4, 8192, %s52, [#allocation6], 128, 128, 8
    $region21: #{tpu_custom_call.1} parent=1 // pred_fallthru
      _
    // Predicated region
    $region22: #{tpu_custom_call.1} parent=1 // pred_check
      _
    $region23: #{tpu_custom_call.1} parent=1 // pred_check_branch
      %59 = sbr.rel (0) target = $region25
    $region24: #{tpu_custom_call.1} parent=1 // pred_region
      _
    $region25: #{tpu_custom_call.1} parent=1 // pred_fallthru
      _
    // Predicated region
    $region26: #{tpu_custom_call.1} parent=1 // pred_check
      _
    $region27: #{tpu_custom_call.1} parent=1 // pred_check_branch
      %61 = sbr.rel (0) target = $region29
    $region28: #{tpu_custom_call.1} parent=1 // pred_region
      _
    $region29: #{tpu_custom_call.1} parent=1 // pred_fallthru
      _
    // Predicated region
    $region30: #{tpu_custom_call.1} parent=1 // pred_check
      _
    $region31: #{tpu_custom_call.1} parent=1 // pred_check_branch
      %63 = sbr.rel (0) target = $region33
    $region32: #{tpu_custom_call.1} parent=1 // pred_region
      %s65 = ssub.s32 2048, 2048
      %66 = vsyncadd [#allocation9], %s65
      %s67 = sshll.u32 [#allocation8], 4
      %s68 = int_to_ptr.vmem [resolvable:$true] %s67
      %73 = dma.hbm_to_vmem [thread:$0]  %s7, 2048, %s68, [#allocation9], 64, 64, 4
    $region33: #{tpu_custom_call.1} parent=1 // pred_fallthru
      _
    // Predicated region
    $region34: #{tpu_custom_call.1} parent=1 // pred_check
      _
    $region35: #{tpu_custom_call.1} parent=1 // pred_check_branch
      %75 = sbr.rel (0) target = $region37
    $region36: #{tpu_custom_call.1} parent=1 // pred_region
      _
    $region37: #{tpu_custom_call.1} parent=1 // pred_fallthru
      _
    // Predicated region
    $region38: #{tpu_custom_call.1} parent=1 // pred_check
      _
    $region39: #{tpu_custom_call.1} parent=1 // pred_check_branch
      %77 = sbr.rel (0) target = $region41
    $region40: #{tpu_custom_call.1} parent=1 // pred_region
      %78 = dma.done [#allocation3], 1024
    $region41: #{tpu_custom_call.1} parent=1 // pred_fallthru
      _
    // Predicated region
    $region42: #{tpu_custom_call.1} parent=1 // pred_check
      _
    $region43: #{tpu_custom_call.1} parent=1 // pred_check_branch
      %80 = sbr.rel (0) target = $region45
    $region44: #{tpu_custom_call.1} parent=1 // pred_region
      %81 = dma.done [#allocation6], 32768
    $region45: #{tpu_custom_call.1} parent=1 // pred_fallthru
      _
    // Predicated region
    $region46: #{tpu_custom_call.1} parent=1 // pred_check
      _
    $region47: #{tpu_custom_call.1} parent=1 // pred_check_branch
      %83 = sbr.rel (0) target = $region49
    $region48: #{tpu_custom_call.1} parent=1 // pred_region
      %84 = dma.done [#allocation6], 8192
    $region49: #{tpu_custom_call.1} parent=1 // pred_fallthru
      _
    // Predicated region
    $region50: #{tpu_custom_call.1} parent=1 // pred_check
      _
    $region51: #{tpu_custom_call.1} parent=1 // pred_check_branch
      %86 = sbr.rel (0) target = $region53
    $region52: #{tpu_custom_call.1} parent=1 // pred_region
      %87 = dma.done [#allocation9], 2048
    $region53: #{tpu_custom_call.1} parent=1 // pred_fallthru
      _
    %v89 = vld [vmem:[#allocation2] sm:$0xff]
    %v90 = vld [vmem:[#allocation2 + $0x8] sm:$0xff]
    %v91 = vld [vmem:[#allocation2 + $0x10] sm:$0xff]
    %v92 = vld [vmem:[#allocation2 + $0x18] sm:$0xff]
    %v93 = vld [vmem:[#allocation2 + $0x20] sm:$0xff]
    %v94 = vld [vmem:[#allocation2 + $0x28] sm:$0xff]
    %v95 = vld [vmem:[#allocation2 + $0x30] sm:$0xff]
    %v96 = vld [vmem:[#allocation2 + $0x38] sm:$0xff]
    %v97 = vld [vmem:[#allocation5] sm:$0xff]
    %v98 = vld [vmem:[#allocation5 + $0x8] sm:$0xff]
    %v99 = vld [vmem:[#allocation5 + $0x10] sm:$0xff]
    %v100 = vld [vmem:[#allocation5 + $0x18] sm:$0xff]
    %v101 = vld [vmem:[#allocation5 + $0x20] sm:$0xff]
    %v102 = vld [vmem:[#allocation5 + $0x28] sm:$0xff]
    %v103 = vld [vmem:[#allocation5 + $0x30] sm:$0xff]
    %v104 = vld [vmem:[#allocation5 + $0x38] sm:$0xff]
    %v105 = vld [vmem:[#allocation5 + $0x40] sm:$0xff]
    %v106 = vld [vmem:[#allocation5 + $0x48] sm:$0xff]
    %v107 = vld [vmem:[#allocation5 + $0x50] sm:$0xff]
    %v108 = vld [vmem:[#allocation5 + $0x58] sm:$0xff]
    %v109 = vld [vmem:[#allocation5 + $0x60] sm:$0xff]
    %v110 = vld [vmem:[#allocation5 + $0x68] sm:$0xff]
    %v111 = vld [vmem:[#allocation5 + $0x70] sm:$0xff]
    %v112 = vld [vmem:[#allocation5 + $0x78] sm:$0xff]
    %v113 = vld [vmem:[#allocation5 + $0x80] sm:$0xff]
    %v114 = vld [vmem:[#allocation5 + $0x88] sm:$0xff]
    %v115 = vld [vmem:[#allocation5 + $0x90] sm:$0xff]
    %v116 = vld [vmem:[#allocation5 + $0x98] sm:$0xff]
    %v117 = vld [vmem:[#allocation5 + $0xa0] sm:$0xff]
    %v118 = vld [vmem:[#allocation5 + $0xa8] sm:$0xff]
    %v119 = vld [vmem:[#allocation5 + $0xb0] sm:$0xff]
    %v120 = vld [vmem:[#allocation5 + $0xb8] sm:$0xff]
    %v121 = vld [vmem:[#allocation5 + $0xc0] sm:$0xff]
    %v122 = vld [vmem:[#allocation5 + $0xc8] sm:$0xff]
    %v123 = vld [vmem:[#allocation5 + $0xd0] sm:$0xff]
    %v124 = vld [vmem:[#allocation5 + $0xd8] sm:$0xff]
    %v125 = vld [vmem:[#allocation5 + $0xe0] sm:$0xff]
    %v126 = vld [vmem:[#allocation5 + $0xe8] sm:$0xff]
    %v127 = vld [vmem:[#allocation5 + $0xf0] sm:$0xff]
    %v128 = vld [vmem:[#allocation5 + $0xf8] sm:$0xff]
    %v129 = vld [vmem:[#allocation5 + $0x100] sm:$0xff]
    %v130 = vld [vmem:[#allocation5 + $0x108] sm:$0xff]
    %v131 = vld [vmem:[#allocation5 + $0x110] sm:$0xff]
    %v132 = vld [vmem:[#allocation5 + $0x118] sm:$0xff]
    %v133 = vld [vmem:[#allocation5 + $0x120] sm:$0xff]
    %v134 = vld [vmem:[#allocation5 + $0x128] sm:$0xff]
    %v135 = vld [vmem:[#allocation5 + $0x130] sm:$0xff]
    %v136 = vld [vmem:[#allocation5 + $0x138] sm:$0xff]
    %v137 = vld [vmem:[#allocation5 + $0x140] sm:$0xff]
    %v138 = vld [vmem:[#allocation5 + $0x148] sm:$0xff]
    %v139 = vld [vmem:[#allocation5 + $0x150] sm:$0xff]
    %v140 = vld [vmem:[#allocation5 + $0x158] sm:$0xff]
    %v141 = vld [vmem:[#allocation5 + $0x160] sm:$0xff]
    %v142 = vld [vmem:[#allocation5 + $0x168] sm:$0xff]
    %v143 = vld [vmem:[#allocation5 + $0x170] sm:$0xff]
    %v144 = vld [vmem:[#allocation5 + $0x178] sm:$0xff]
    %v145 = vld [vmem:[#allocation5 + $0x180] sm:$0xff]
    %v146 = vld [vmem:[#allocation5 + $0x188] sm:$0xff]
    %v147 = vld [vmem:[#allocation5 + $0x190] sm:$0xff]
    %v148 = vld [vmem:[#allocation5 + $0x198] sm:$0xff]
    %v149 = vld [vmem:[#allocation5 + $0x1a0] sm:$0xff]
    %v150 = vld [vmem:[#allocation5 + $0x1a8] sm:$0xff]
    %v151 = vld [vmem:[#allocation5 + $0x1b0] sm:$0xff]
    %v152 = vld [vmem:[#allocation5 + $0x1b8] sm:$0xff]
    %v153 = vld [vmem:[#allocation5 + $0x1c0] sm:$0xff]
    %v154 = vld [vmem:[#allocation5 + $0x1c8] sm:$0xff]
    %v155 = vld [vmem:[#allocation5 + $0x1d0] sm:$0xff]
    %v156 = vld [vmem:[#allocation5 + $0x1d8] sm:$0xff]
    %v157 = vld [vmem:[#allocation5 + $0x1e0] sm:$0xff]
    %v158 = vld [vmem:[#allocation5 + $0x1e8] sm:$0xff]
    %v159 = vld [vmem:[#allocation5 + $0x1f0] sm:$0xff]
    %v160 = vld [vmem:[#allocation5 + $0x1f8] sm:$0xff]
    %v161 = vld [vmem:[#allocation5 + $0x200] sm:$0xff]
    %v162 = vld [vmem:[#allocation5 + $0x208] sm:$0xff]
    %v163 = vld [vmem:[#allocation5 + $0x210] sm:$0xff]
    %v164 = vld [vmem:[#allocation5 + $0x218] sm:$0xff]
    %v165 = vld [vmem:[#allocation5 + $0x220] sm:$0xff]
    %v166 = vld [vmem:[#allocation5 + $0x228] sm:$0xff]
    %v167 = vld [vmem:[#allocation5 + $0x230] sm:$0xff]
    %v168 = vld [vmem:[#allocation5 + $0x238] sm:$0xff]
    %v169 = vld [vmem:[#allocation5 + $0x240] sm:$0xff]
    %v170 = vld [vmem:[#allocation5 + $0x248] sm:$0xff]
    %v171 = vld [vmem:[#allocation5 + $0x250] sm:$0xff]
    %v172 = vld [vmem:[#allocation5 + $0x258] sm:$0xff]
    %v173 = vld [vmem:[#allocation5 + $0x260] sm:$0xff]
    %v174 = vld [vmem:[#allocation5 + $0x268] sm:$0xff]
    %v175 = vld [vmem:[#allocation5 + $0x270] sm:$0xff]
    %v176 = vld [vmem:[#allocation5 + $0x278] sm:$0xff]
    %v177 = vld [vmem:[#allocation5 + $0x280] sm:$0xff]
    %v178 = vld [vmem:[#allocation5 + $0x288] sm:$0xff]
    %v179 = vld [vmem:[#allocation5 + $0x290] sm:$0xff]
    %v180 = vld [vmem:[#allocation5 + $0x298] sm:$0xff]
    %v181 = vld [vmem:[#allocation5 + $0x2a0] sm:$0xff]
    %v182 = vld [vmem:[#allocation5 + $0x2a8] sm:$0xff]
    %v183 = vld [vmem:[#allocation5 + $0x2b0] sm:$0xff]
    %v184 = vld [vmem:[#allocation5 + $0x2b8] sm:$0xff]
    %v185 = vld [vmem:[#allocation5 + $0x2c0] sm:$0xff]
    %v186 = vld [vmem:[#allocation5 + $0x2c8] sm:$0xff]
    %v187 = vld [vmem:[#allocation5 + $0x2d0] sm:$0xff]
    %v188 = vld [vmem:[#allocation5 + $0x2d8] sm:$0xff]
    %v189 = vld [vmem:[#allocation5 + $0x2e0] sm:$0xff]
    %v190 = vld [vmem:[#allocation5 + $0x2e8] sm:$0xff]
    %v191 = vld [vmem:[#allocation5 + $0x2f0] sm:$0xff]
    %v192 = vld [vmem:[#allocation5 + $0x2f8] sm:$0xff]
    %v193 = vld [vmem:[#allocation5 + $0x300] sm:$0xff]
    %v194 = vld [vmem:[#allocation5 + $0x308] sm:$0xff]
    %v195 = vld [vmem:[#allocation5 + $0x310] sm:$0xff]
    %v196 = vld [vmem:[#allocation5 + $0x318] sm:$0xff]
    %v197 = vld [vmem:[#allocation5 + $0x320] sm:$0xff]
    %v198 = vld [vmem:[#allocation5 + $0x328] sm:$0xff]
    %v199 = vld [vmem:[#allocation5 + $0x330] sm:$0xff]
    %v200 = vld [vmem:[#allocation5 + $0x338] sm:$0xff]
    %v201 = vld [vmem:[#allocation5 + $0x340] sm:$0xff]
    %v202 = vld [vmem:[#allocation5 + $0x348] sm:$0xff]
    %v203 = vld [vmem:[#allocation5 + $0x350] sm:$0xff]
    %v204 = vld [vmem:[#allocation5 + $0x358] sm:$0xff]
    %v205 = vld [vmem:[#allocation5 + $0x360] sm:$0xff]
    %v206 = vld [vmem:[#allocation5 + $0x368] sm:$0xff]
    %v207 = vld [vmem:[#allocation5 + $0x370] sm:$0xff]
    %v208 = vld [vmem:[#allocation5 + $0x378] sm:$0xff]
    %v209 = vld [vmem:[#allocation5 + $0x380] sm:$0xff]
    %v210 = vld [vmem:[#allocation5 + $0x388] sm:$0xff]
    %v211 = vld [vmem:[#allocation5 + $0x390] sm:$0xff]
    %v212 = vld [vmem:[#allocation5 + $0x398] sm:$0xff]
    %v213 = vld [vmem:[#allocation5 + $0x3a0] sm:$0xff]
    %v214 = vld [vmem:[#allocation5 + $0x3a8] sm:$0xff]
    %v215 = vld [vmem:[#allocation5 + $0x3b0] sm:$0xff]
    %v216 = vld [vmem:[#allocation5 + $0x3b8] sm:$0xff]
    %v217 = vld [vmem:[#allocation5 + $0x3c0] sm:$0xff]
    %v218 = vld [vmem:[#allocation5 + $0x3c8] sm:$0xff]
    %v219 = vld [vmem:[#allocation5 + $0x3d0] sm:$0xff]
    %v220 = vld [vmem:[#allocation5 + $0x3d8] sm:$0xff]
    %v221 = vld [vmem:[#allocation5 + $0x3e0] sm:$0xff]
    %v222 = vld [vmem:[#allocation5 + $0x3e8] sm:$0xff]
    %v223 = vld [vmem:[#allocation5 + $0x3f0] sm:$0xff]
    %v224 = vld [vmem:[#allocation5 + $0x3f8] sm:$0xff]
    %v225 = vld [vmem:[#allocation5 + $0x400] sm:$0xff]
    %v226 = vld [vmem:[#allocation5 + $0x408] sm:$0xff]
    %v227 = vld [vmem:[#allocation5 + $0x410] sm:$0xff]
    %v228 = vld [vmem:[#allocation5 + $0x418] sm:$0xff]
    %v229 = vld [vmem:[#allocation5 + $0x420] sm:$0xff]
    %v230 = vld [vmem:[#allocation5 + $0x428] sm:$0xff]
    %v231 = vld [vmem:[#allocation5 + $0x430] sm:$0xff]
    %v232 = vld [vmem:[#allocation5 + $0x438] sm:$0xff]
    %v233 = vld [vmem:[#allocation5 + $0x440] sm:$0xff]
    %v234 = vld [vmem:[#allocation5 + $0x448] sm:$0xff]
    %v235 = vld [vmem:[#allocation5 + $0x450] sm:$0xff]
    %v236 = vld [vmem:[#allocation5 + $0x458] sm:$0xff]
    %v237 = vld [vmem:[#allocation5 + $0x460] sm:$0xff]
    %v238 = vld [vmem:[#allocation5 + $0x468] sm:$0xff]
    %v239 = vld [vmem:[#allocation5 + $0x470] sm:$0xff]
    %v240 = vld [vmem:[#allocation5 + $0x478] sm:$0xff]
    %v241 = vld [vmem:[#allocation5 + $0x480] sm:$0xff]
    %v242 = vld [vmem:[#allocation5 + $0x488] sm:$0xff]
    %v243 = vld [vmem:[#allocation5 + $0x490] sm:$0xff]
    %v244 = vld [vmem:[#allocation5 + $0x498] sm:$0xff]
    %v245 = vld [vmem:[#allocation5 + $0x4a0] sm:$0xff]
    %v246 = vld [vmem:[#allocation5 + $0x4a8] sm:$0xff]
    %v247 = vld [vmem:[#allocation5 + $0x4b0] sm:$0xff]
    %v248 = vld [vmem:[#allocation5 + $0x4b8] sm:$0xff]
    %v249 = vld [vmem:[#allocation5 + $0x4c0] sm:$0xff]
    %v250 = vld [vmem:[#allocation5 + $0x4c8] sm:$0xff]
    %v251 = vld [vmem:[#allocation5 + $0x4d0] sm:$0xff]
    %v252 = vld [vmem:[#allocation5 + $0x4d8] sm:$0xff]
    %v253 = vld [vmem:[#allocation5 + $0x4e0] sm:$0xff]
    %v254 = vld [vmem:[#allocation5 + $0x4e8] sm:$0xff]
    %v255 = vld [vmem:[#allocation5 + $0x4f0] sm:$0xff]
    %v256 = vld [vmem:[#allocation5 + $0x4f8] sm:$0xff]
    %v257 = vld [vmem:[#allocation5 + $0x500] sm:$0xff]
    %v258 = vld [vmem:[#allocation5 + $0x508] sm:$0xff]
    %v259 = vld [vmem:[#allocation5 + $0x510] sm:$0xff]
    %v260 = vld [vmem:[#allocation5 + $0x518] sm:$0xff]
    %v261 = vld [vmem:[#allocation5 + $0x520] sm:$0xff]
    %v262 = vld [vmem:[#allocation5 + $0x528] sm:$0xff]
    %v263 = vld [vmem:[#allocation5 + $0x530] sm:$0xff]
    %v264 = vld [vmem:[#allocation5 + $0x538] sm:$0xff]
    %v265 = vld [vmem:[#allocation5 + $0x540] sm:$0xff]
    %v266 = vld [vmem:[#allocation5 + $0x548] sm:$0xff]
    %v267 = vld [vmem:[#allocation5 + $0x550] sm:$0xff]
    %v268 = vld [vmem:[#allocation5 + $0x558] sm:$0xff]
    %v269 = vld [vmem:[#allocation5 + $0x560] sm:$0xff]
    %v270 = vld [vmem:[#allocation5 + $0x568] sm:$0xff]
    %v271 = vld [vmem:[#allocation5 + $0x570] sm:$0xff]
    %v272 = vld [vmem:[#allocation5 + $0x578] sm:$0xff]
    %v273 = vld [vmem:[#allocation5 + $0x580] sm:$0xff]
    %v274 = vld [vmem:[#allocation5 + $0x588] sm:$0xff]
    %v275 = vld [vmem:[#allocation5 + $0x590] sm:$0xff]
    %v276 = vld [vmem:[#allocation5 + $0x598] sm:$0xff]
    %v277 = vld [vmem:[#allocation5 + $0x5a0] sm:$0xff]
    %v278 = vld [vmem:[#allocation5 + $0x5a8] sm:$0xff]
    %v279 = vld [vmem:[#allocation5 + $0x5b0] sm:$0xff]
    %v280 = vld [vmem:[#allocation5 + $0x5b8] sm:$0xff]
    %v281 = vld [vmem:[#allocation5 + $0x5c0] sm:$0xff]
    %v282 = vld [vmem:[#allocation5 + $0x5c8] sm:$0xff]
    %v283 = vld [vmem:[#allocation5 + $0x5d0] sm:$0xff]
    %v284 = vld [vmem:[#allocation5 + $0x5d8] sm:$0xff]
    %v285 = vld [vmem:[#allocation5 + $0x5e0] sm:$0xff]
    %v286 = vld [vmem:[#allocation5 + $0x5e8] sm:$0xff]
    %v287 = vld [vmem:[#allocation5 + $0x5f0] sm:$0xff]
    %v288 = vld [vmem:[#allocation5 + $0x5f8] sm:$0xff]
    %v289 = vld [vmem:[#allocation5 + $0x600] sm:$0xff]
    %v290 = vld [vmem:[#allocation5 + $0x608] sm:$0xff]
    %v291 = vld [vmem:[#allocation5 + $0x610] sm:$0xff]
    %v292 = vld [vmem:[#allocation5 + $0x618] sm:$0xff]
    %v293 = vld [vmem:[#allocation5 + $0x620] sm:$0xff]
    %v294 = vld [vmem:[#allocation5 + $0x628] sm:$0xff]
    %v295 = vld [vmem:[#allocation5 + $0x630] sm:$0xff]
    %v296 = vld [vmem:[#allocation5 + $0x638] sm:$0xff]
    %v297 = vld [vmem:[#allocation5 + $0x640] sm:$0xff]
    %v298 = vld [vmem:[#allocation5 + $0x648] sm:$0xff]
    %v299 = vld [vmem:[#allocation5 + $0x650] sm:$0xff]
    %v300 = vld [vmem:[#allocation5 + $0x658] sm:$0xff]
    %v301 = vld [vmem:[#allocation5 + $0x660] sm:$0xff]
    %v302 = vld [vmem:[#allocation5 + $0x668] sm:$0xff]
    %v303 = vld [vmem:[#allocation5 + $0x670] sm:$0xff]
    %v304 = vld [vmem:[#allocation5 + $0x678] sm:$0xff]
    %v305 = vld [vmem:[#allocation5 + $0x680] sm:$0xff]
    %v306 = vld [vmem:[#allocation5 + $0x688] sm:$0xff]
    %v307 = vld [vmem:[#allocation5 + $0x690] sm:$0xff]
    %v308 = vld [vmem:[#allocation5 + $0x698] sm:$0xff]
    %v309 = vld [vmem:[#allocation5 + $0x6a0] sm:$0xff]
    %v310 = vld [vmem:[#allocation5 + $0x6a8] sm:$0xff]
    %v311 = vld [vmem:[#allocation5 + $0x6b0] sm:$0xff]
    %v312 = vld [vmem:[#allocation5 + $0x6b8] sm:$0xff]
    %v313 = vld [vmem:[#allocation5 + $0x6c0] sm:$0xff]
    %v314 = vld [vmem:[#allocation5 + $0x6c8] sm:$0xff]
    %v315 = vld [vmem:[#allocation5 + $0x6d0] sm:$0xff]
    %v316 = vld [vmem:[#allocation5 + $0x6d8] sm:$0xff]
    %v317 = vld [vmem:[#allocation5 + $0x6e0] sm:$0xff]
    %v318 = vld [vmem:[#allocation5 + $0x6e8] sm:$0xff]
    %v319 = vld [vmem:[#allocation5 + $0x6f0] sm:$0xff]
    %v320 = vld [vmem:[#allocation5 + $0x6f8] sm:$0xff]
    %v321 = vld [vmem:[#allocation5 + $0x700] sm:$0xff]
    %v322 = vld [vmem:[#allocation5 + $0x708] sm:$0xff]
    %v323 = vld [vmem:[#allocation5 + $0x710] sm:$0xff]
    %v324 = vld [vmem:[#allocation5 + $0x718] sm:$0xff]
    %v325 = vld [vmem:[#allocation5 + $0x720] sm:$0xff]
    %v326 = vld [vmem:[#allocation5 + $0x728] sm:$0xff]
    %v327 = vld [vmem:[#allocation5 + $0x730] sm:$0xff]
    %v328 = vld [vmem:[#allocation5 + $0x738] sm:$0xff]
    %v329 = vld [vmem:[#allocation5 + $0x740] sm:$0xff]
    %v330 = vld [vmem:[#allocation5 + $0x748] sm:$0xff]
    %v331 = vld [vmem:[#allocation5 + $0x750] sm:$0xff]
    %v332 = vld [vmem:[#allocation5 + $0x758] sm:$0xff]
    %v333 = vld [vmem:[#allocation5 + $0x760] sm:$0xff]
    %v334 = vld [vmem:[#allocation5 + $0x768] sm:$0xff]
    %v335 = vld [vmem:[#allocation5 + $0x770] sm:$0xff]
    %v336 = vld [vmem:[#allocation5 + $0x778] sm:$0xff]
    %v337 = vld [vmem:[#allocation5 + $0x780] sm:$0xff]
    %v338 = vld [vmem:[#allocation5 + $0x788] sm:$0xff]
    %v339 = vld [vmem:[#allocation5 + $0x790] sm:$0xff]
    %v340 = vld [vmem:[#allocation5 + $0x798] sm:$0xff]
    %v341 = vld [vmem:[#allocation5 + $0x7a0] sm:$0xff]
    %v342 = vld [vmem:[#allocation5 + $0x7a8] sm:$0xff]
    %v343 = vld [vmem:[#allocation5 + $0x7b0] sm:$0xff]
    %v344 = vld [vmem:[#allocation5 + $0x7b8] sm:$0xff]
    %v345 = vld [vmem:[#allocation5 + $0x7c0] sm:$0xff]
    %v346 = vld [vmem:[#allocation5 + $0x7c8] sm:$0xff]
    %v347 = vld [vmem:[#allocation5 + $0x7d0] sm:$0xff]
    %v348 = vld [vmem:[#allocation5 + $0x7d8] sm:$0xff]
    %v349 = vld [vmem:[#allocation5 + $0x7e0] sm:$0xff]
    %v350 = vld [vmem:[#allocation5 + $0x7e8] sm:$0xff]
    %v351 = vld [vmem:[#allocation5 + $0x7f0] sm:$0xff]
    %v352 = vld [vmem:[#allocation5 + $0x7f8] sm:$0xff]
    %v361 = vunpack.c.l.b16 %v89
    %v362 = vunpack.c.h.b16 %v89
    %v363 = vunpack.c.l.b16 %v90
    %v364 = vunpack.c.h.b16 %v90
    %v365 = vunpack.c.l.b16 %v91
    %v366 = vunpack.c.h.b16 %v91
    %v367 = vunpack.c.l.b16 %v92
    %v368 = vunpack.c.h.b16 %v92
    %v369 = vunpack.c.l.b16 %v93
    %v370 = vunpack.c.h.b16 %v93
    %v371 = vunpack.c.l.b16 %v94
    %v372 = vunpack.c.h.b16 %v94
    %v373 = vunpack.c.l.b16 %v95
    %v374 = vunpack.c.h.b16 %v95
    %v375 = vunpack.c.l.b16 %v96
    %v376 = vunpack.c.h.b16 %v96
    %v377 = vpack.c.b16 %v369, %v361
    %v378 = vpack.c.b16 %v370, %v362
    %v379 = vpack.c.b16 %v371, %v363
    %v380 = vpack.c.b16 %v372, %v364
    %v381 = vpack.c.b16 %v373, %v365
    %v382 = vpack.c.b16 %v374, %v366
    %v383 = vpack.c.b16 %v375, %v367
    %v384 = vpack.c.b16 %v376, %v368
    %v649 = vunpack.c.l.b16 %v97
    %v650 = vunpack.c.h.b16 %v97
    %v651 = vunpack.c.l.b16 %v98
    %v652 = vunpack.c.h.b16 %v98
    %v653 = vunpack.c.l.b16 %v99
    %v654 = vunpack.c.h.b16 %v99
    %v655 = vunpack.c.l.b16 %v100
    %v656 = vunpack.c.h.b16 %v100
    %v657 = vunpack.c.l.b16 %v101
    %v658 = vunpack.c.h.b16 %v101
    %v659 = vunpack.c.l.b16 %v102
    %v660 = vunpack.c.h.b16 %v102
    %v661 = vunpack.c.l.b16 %v103
    %v662 = vunpack.c.h.b16 %v103
    %v663 = vunpack.c.l.b16 %v104
    %v664 = vunpack.c.h.b16 %v104
    %v665 = vunpack.c.l.b16 %v105
    %v666 = vunpack.c.h.b16 %v105
    %v667 = vunpack.c.l.b16 %v106
    %v668 = vunpack.c.h.b16 %v106
    %v669 = vunpack.c.l.b16 %v107
    %v670 = vunpack.c.h.b16 %v107
    %v671 = vunpack.c.l.b16 %v108
    %v672 = vunpack.c.h.b16 %v108
    %v673 = vunpack.c.l.b16 %v109
    %v674 = vunpack.c.h.b16 %v109
    %v675 = vunpack.c.l.b16 %v110
    %v676 = vunpack.c.h.b16 %v110
    %v677 = vunpack.c.l.b16 %v111
    %v678 = vunpack.c.h.b16 %v111
    %v679 = vunpack.c.l.b16 %v112
    %v680 = vunpack.c.h.b16 %v112
    %v681 = vunpack.c.l.b16 %v113
    %v682 = vunpack.c.h.b16 %v113
    %v683 = vunpack.c.l.b16 %v114
    %v684 = vunpack.c.h.b16 %v114
    %v685 = vunpack.c.l.b16 %v115
    %v686 = vunpack.c.h.b16 %v115
    %v687 = vunpack.c.l.b16 %v116
    %v688 = vunpack.c.h.b16 %v116
    %v689 = vunpack.c.l.b16 %v117
    %v690 = vunpack.c.h.b16 %v117
    %v691 = vunpack.c.l.b16 %v118
    %v692 = vunpack.c.h.b16 %v118
    %v693 = vunpack.c.l.b16 %v119
    %v694 = vunpack.c.h.b16 %v119
    %v695 = vunpack.c.l.b16 %v120
    %v696 = vunpack.c.h.b16 %v120
    %v697 = vunpack.c.l.b16 %v121
    %v698 = vunpack.c.h.b16 %v121
    %v699 = vunpack.c.l.b16 %v122
    %v700 = vunpack.c.h.b16 %v122
    %v701 = vunpack.c.l.b16 %v123
    %v702 = vunpack.c.h.b16 %v123
    %v703 = vunpack.c.l.b16 %v124
    %v704 = vunpack.c.h.b16 %v124
    %v705 = vunpack.c.l.b16 %v125
    %v706 = vunpack.c.h.b16 %v125
    %v707 = vunpack.c.l.b16 %v126
    %v708 = vunpack.c.h.b16 %v126
    %v709 = vunpack.c.l.b16 %v127
    %v710 = vunpack.c.h.b16 %v127
    %v711 = vunpack.c.l.b16 %v128
    %v712 = vunpack.c.h.b16 %v128
    %v713 = vunpack.c.l.b16 %v129
    %v714 = vunpack.c.h.b16 %v129
    %v715 = vunpack.c.l.b16 %v130
    %v716 = vunpack.c.h.b16 %v130
    %v717 = vunpack.c.l.b16 %v131
    %v718 = vunpack.c.h.b16 %v131
    %v719 = vunpack.c.l.b16 %v132
    %v720 = vunpack.c.h.b16 %v132
    %v721 = vunpack.c.l.b16 %v133
    %v722 = vunpack.c.h.b16 %v133
    %v723 = vunpack.c.l.b16 %v134
    %v724 = vunpack.c.h.b16 %v134
    %v725 = vunpack.c.l.b16 %v135
    %v726 = vunpack.c.h.b16 %v135
    %v727 = vunpack.c.l.b16 %v136
    %v728 = vunpack.c.h.b16 %v136
    %v729 = vunpack.c.l.b16 %v137
    %v730 = vunpack.c.h.b16 %v137
    %v731 = vunpack.c.l.b16 %v138
    %v732 = vunpack.c.h.b16 %v138
    %v733 = vunpack.c.l.b16 %v139
    %v734 = vunpack.c.h.b16 %v139
    %v735 = vunpack.c.l.b16 %v140
    %v736 = vunpack.c.h.b16 %v140
    %v737 = vunpack.c.l.b16 %v141
    %v738 = vunpack.c.h.b16 %v141
    %v739 = vunpack.c.l.b16 %v142
    %v740 = vunpack.c.h.b16 %v142
    %v741 = vunpack.c.l.b16 %v143
    %v742 = vunpack.c.h.b16 %v143
    %v743 = vunpack.c.l.b16 %v144
    %v744 = vunpack.c.h.b16 %v144
    %v745 = vunpack.c.l.b16 %v145
    %v746 = vunpack.c.h.b16 %v145
    %v747 = vunpack.c.l.b16 %v146
    %v748 = vunpack.c.h.b16 %v146
    %v749 = vunpack.c.l.b16 %v147
    %v750 = vunpack.c.h.b16 %v147
    %v751 = vunpack.c.l.b16 %v148
    %v752 = vunpack.c.h.b16 %v148
    %v753 = vunpack.c.l.b16 %v149
    %v754 = vunpack.c.h.b16 %v149
    %v755 = vunpack.c.l.b16 %v150
    %v756 = vunpack.c.h.b16 %v150
    %v757 = vunpack.c.l.b16 %v151
    %v758 = vunpack.c.h.b16 %v151
    %v759 = vunpack.c.l.b16 %v152
    %v760 = vunpack.c.h.b16 %v152
    %v761 = vunpack.c.l.b16 %v153
    %v762 = vunpack.c.h.b16 %v153
    %v763 = vunpack.c.l.b16 %v154
    %v764 = vunpack.c.h.b16 %v154
    %v765 = vunpack.c.l.b16 %v155
    %v766 = vunpack.c.h.b16 %v155
    %v767 = vunpack.c.l.b16 %v156
    %v768 = vunpack.c.h.b16 %v156
    %v769 = vunpack.c.l.b16 %v157
    %v770 = vunpack.c.h.b16 %v157
    %v771 = vunpack.c.l.b16 %v158
    %v772 = vunpack.c.h.b16 %v158
    %v773 = vunpack.c.l.b16 %v159
    %v774 = vunpack.c.h.b16 %v159
    %v775 = vunpack.c.l.b16 %v160
    %v776 = vunpack.c.h.b16 %v160
    %v777 = vunpack.c.l.b16 %v161
    %v778 = vunpack.c.h.b16 %v161
    %v779 = vunpack.c.l.b16 %v162
    %v780 = vunpack.c.h.b16 %v162
    %v781 = vunpack.c.l.b16 %v163
    %v782 = vunpack.c.h.b16 %v163
    %v783 = vunpack.c.l.b16 %v164
    %v784 = vunpack.c.h.b16 %v164
    %v785 = vunpack.c.l.b16 %v165
    %v786 = vunpack.c.h.b16 %v165
    %v787 = vunpack.c.l.b16 %v166
    %v788 = vunpack.c.h.b16 %v166
    %v789 = vunpack.c.l.b16 %v167
    %v790 = vunpack.c.h.b16 %v167
    %v791 = vunpack.c.l.b16 %v168
    %v792 = vunpack.c.h.b16 %v168
    %v793 = vunpack.c.l.b16 %v169
    %v794 = vunpack.c.h.b16 %v169
    %v795 = vunpack.c.l.b16 %v170
    %v796 = vunpack.c.h.b16 %v170
    %v797 = vunpack.c.l.b16 %v171
    %v798 = vunpack.c.h.b16 %v171
    %v799 = vunpack.c.l.b16 %v172
    %v800 = vunpack.c.h.b16 %v172
    %v801 = vunpack.c.l.b16 %v173
    %v802 = vunpack.c.h.b16 %v173
    %v803 = vunpack.c.l.b16 %v174
    %v804 = vunpack.c.h.b16 %v174
    %v805 = vunpack.c.l.b16 %v175
    %v806 = vunpack.c.h.b16 %v175
    %v807 = vunpack.c.l.b16 %v176
    %v808 = vunpack.c.h.b16 %v176
    %v809 = vunpack.c.l.b16 %v177
    %v810 = vunpack.c.h.b16 %v177
    %v811 = vunpack.c.l.b16 %v178
    %v812 = vunpack.c.h.b16 %v178
    %v813 = vunpack.c.l.b16 %v179
    %v814 = vunpack.c.h.b16 %v179
    %v815 = vunpack.c.l.b16 %v180
    %v816 = vunpack.c.h.b16 %v180
    %v817 = vunpack.c.l.b16 %v181
    %v818 = vunpack.c.h.b16 %v181
    %v819 = vunpack.c.l.b16 %v182
    %v820 = vunpack.c.h.b16 %v182
    %v821 = vunpack.c.l.b16 %v183
    %v822 = vunpack.c.h.b16 %v183
    %v823 = vunpack.c.l.b16 %v184
    %v824 = vunpack.c.h.b16 %v184
    %v825 = vunpack.c.l.b16 %v185
    %v826 = vunpack.c.h.b16 %v185
    %v827 = vunpack.c.l.b16 %v186
    %v828 = vunpack.c.h.b16 %v186
    %v829 = vunpack.c.l.b16 %v187
    %v830 = vunpack.c.h.b16 %v187
    %v831 = vunpack.c.l.b16 %v188
    %v832 = vunpack.c.h.b16 %v188
    %v833 = vunpack.c.l.b16 %v189
    %v834 = vunpack.c.h.b16 %v189
    %v835 = vunpack.c.l.b16 %v190
    %v836 = vunpack.c.h.b16 %v190
    %v837 = vunpack.c.l.b16 %v191
    %v838 = vunpack.c.h.b16 %v191
    %v839 = vunpack.c.l.b16 %v192
    %v840 = vunpack.c.h.b16 %v192
    %v841 = vunpack.c.l.b16 %v193
    %v842 = vunpack.c.h.b16 %v193
    %v843 = vunpack.c.l.b16 %v194
    %v844 = vunpack.c.h.b16 %v194
    %v845 = vunpack.c.l.b16 %v195
    %v846 = vunpack.c.h.b16 %v195
    %v847 = vunpack.c.l.b16 %v196
    %v848 = vunpack.c.h.b16 %v196
    %v849 = vunpack.c.l.b16 %v197
    %v850 = vunpack.c.h.b16 %v197
    %v851 = vunpack.c.l.b16 %v198
    %v852 = vunpack.c.h.b16 %v198
    %v853 = vunpack.c.l.b16 %v199
    %v854 = vunpack.c.h.b16 %v199
    %v855 = vunpack.c.l.b16 %v200
    %v856 = vunpack.c.h.b16 %v200
    %v857 = vunpack.c.l.b16 %v201
    %v858 = vunpack.c.h.b16 %v201
    %v859 = vunpack.c.l.b16 %v202
    %v860 = vunpack.c.h.b16 %v202
    %v861 = vunpack.c.l.b16 %v203
    %v862 = vunpack.c.h.b16 %v203
    %v863 = vunpack.c.l.b16 %v204
    %v864 = vunpack.c.h.b16 %v204
    %v865 = vunpack.c.l.b16 %v205
    %v866 = vunpack.c.h.b16 %v205
    %v867 = vunpack.c.l.b16 %v206
    %v868 = vunpack.c.h.b16 %v206
    %v869 = vunpack.c.l.b16 %v207
    %v870 = vunpack.c.h.b16 %v207
    %v871 = vunpack.c.l.b16 %v208
    %v872 = vunpack.c.h.b16 %v208
    %v873 = vunpack.c.l.b16 %v209
    %v874 = vunpack.c.h.b16 %v209
    %v875 = vunpack.c.l.b16 %v210
    %v876 = vunpack.c.h.b16 %v210
    %v877 = vunpack.c.l.b16 %v211
    %v878 = vunpack.c.h.b16 %v211
    %v879 = vunpack.c.l.b16 %v212
    %v880 = vunpack.c.h.b16 %v212
    %v881 = vunpack.c.l.b16 %v213
    %v882 = vunpack.c.h.b16 %v213
    %v883 = vunpack.c.l.b16 %v214
    %v884 = vunpack.c.h.b16 %v214
    %v885 = vunpack.c.l.b16 %v215
    %v886 = vunpack.c.h.b16 %v215
    %v887 = vunpack.c.l.b16 %v216
    %v888 = vunpack.c.h.b16 %v216
    %v889 = vunpack.c.l.b16 %v217
    %v890 = vunpack.c.h.b16 %v217
    %v891 = vunpack.c.l.b16 %v218
    %v892 = vunpack.c.h.b16 %v218
    %v893 = vunpack.c.l.b16 %v219
    %v894 = vunpack.c.h.b16 %v219
    %v895 = vunpack.c.l.b16 %v220
    %v896 = vunpack.c.h.b16 %v220
    %v897 = vunpack.c.l.b16 %v221
    %v898 = vunpack.c.h.b16 %v221
    %v899 = vunpack.c.l.b16 %v222
    %v900 = vunpack.c.h.b16 %v222
    %v901 = vunpack.c.l.b16 %v223
    %v902 = vunpack.c.h.b16 %v223
    %v903 = vunpack.c.l.b16 %v224
    %v904 = vunpack.c.h.b16 %v224
    %v905 = vunpack.c.l.b16 %v225
    %v906 = vunpack.c.h.b16 %v225
    %v907 = vunpack.c.l.b16 %v226
    %v908 = vunpack.c.h.b16 %v226
    %v909 = vunpack.c.l.b16 %v227
    %v910 = vunpack.c.h.b16 %v227
    %v911 = vunpack.c.l.b16 %v228
    %v912 = vunpack.c.h.b16 %v228
    %v913 = vunpack.c.l.b16 %v229
    %v914 = vunpack.c.h.b16 %v229
    %v915 = vunpack.c.l.b16 %v230
    %v916 = vunpack.c.h.b16 %v230
    %v917 = vunpack.c.l.b16 %v231
    %v918 = vunpack.c.h.b16 %v231
    %v919 = vunpack.c.l.b16 %v232
    %v920 = vunpack.c.h.b16 %v232
    %v921 = vunpack.c.l.b16 %v233
    %v922 = vunpack.c.h.b16 %v233
    %v923 = vunpack.c.l.b16 %v234
    %v924 = vunpack.c.h.b16 %v234
    %v925 = vunpack.c.l.b16 %v235
    %v926 = vunpack.c.h.b16 %v235
    %v927 = vunpack.c.l.b16 %v236
    %v928 = vunpack.c.h.b16 %v236
    %v929 = vunpack.c.l.b16 %v237
    %v930 = vunpack.c.h.b16 %v237
    %v931 = vunpack.c.l.b16 %v238
    %v932 = vunpack.c.h.b16 %v238
    %v933 = vunpack.c.l.b16 %v239
    %v934 = vunpack.c.h.b16 %v239
    %v935 = vunpack.c.l.b16 %v240
    %v936 = vunpack.c.h.b16 %v240
    %v937 = vunpack.c.l.b16 %v241
    %v938 = vunpack.c.h.b16 %v241
    %v939 = vunpack.c.l.b16 %v242
    %v940 = vunpack.c.h.b16 %v242
    %v941 = vunpack.c.l.b16 %v243
    %v942 = vunpack.c.h.b16 %v243
    %v943 = vunpack.c.l.b16 %v244
    %v944 = vunpack.c.h.b16 %v244
    %v945 = vunpack.c.l.b16 %v245
    %v946 = vunpack.c.h.b16 %v245
    %v947 = vunpack.c.l.b16 %v246
    %v948 = vunpack.c.h.b16 %v246
    %v949 = vunpack.c.l.b16 %v247
    %v950 = vunpack.c.h.b16 %v247
    %v951 = vunpack.c.l.b16 %v248
    %v952 = vunpack.c.h.b16 %v248
    %v953 = vunpack.c.l.b16 %v249
    %v954 = vunpack.c.h.b16 %v249
    %v955 = vunpack.c.l.b16 %v250
    %v956 = vunpack.c.h.b16 %v250
    %v957 = vunpack.c.l.b16 %v251
    %v958 = vunpack.c.h.b16 %v251
    %v959 = vunpack.c.l.b16 %v252
    %v960 = vunpack.c.h.b16 %v252
    %v961 = vunpack.c.l.b16 %v253
    %v962 = vunpack.c.h.b16 %v253
    %v963 = vunpack.c.l.b16 %v254
    %v964 = vunpack.c.h.b16 %v254
    %v965 = vunpack.c.l.b16 %v255
    %v966 = vunpack.c.h.b16 %v255
    %v967 = vunpack.c.l.b16 %v256
    %v968 = vunpack.c.h.b16 %v256
    %v969 = vunpack.c.l.b16 %v257
    %v970 = vunpack.c.h.b16 %v257
    %v971 = vunpack.c.l.b16 %v258
    %v972 = vunpack.c.h.b16 %v258
    %v973 = vunpack.c.l.b16 %v259
    %v974 = vunpack.c.h.b16 %v259
    %v975 = vunpack.c.l.b16 %v260
    %v976 = vunpack.c.h.b16 %v260
    %v977 = vunpack.c.l.b16 %v261
    %v978 = vunpack.c.h.b16 %v261
    %v979 = vunpack.c.l.b16 %v262
    %v980 = vunpack.c.h.b16 %v262
    %v981 = vunpack.c.l.b16 %v263
    %v982 = vunpack.c.h.b16 %v263
    %v983 = vunpack.c.l.b16 %v264
    %v984 = vunpack.c.h.b16 %v264
    %v985 = vunpack.c.l.b16 %v265
    %v986 = vunpack.c.h.b16 %v265
    %v987 = vunpack.c.l.b16 %v266
    %v988 = vunpack.c.h.b16 %v266
    %v989 = vunpack.c.l.b16 %v267
    %v990 = vunpack.c.h.b16 %v267
    %v991 = vunpack.c.l.b16 %v268
    %v992 = vunpack.c.h.b16 %v268
    %v993 = vunpack.c.l.b16 %v269
    %v994 = vunpack.c.h.b16 %v269
    %v995 = vunpack.c.l.b16 %v270
    %v996 = vunpack.c.h.b16 %v270
    %v997 = vunpack.c.l.b16 %v271
    %v998 = vunpack.c.h.b16 %v271
    %v999 = vunpack.c.l.b16 %v272
    %v1000 = vunpack.c.h.b16 %v272
    %v1001 = vunpack.c.l.b16 %v273
    %v1002 = vunpack.c.h.b16 %v273
    %v1003 = vunpack.c.l.b16 %v274
    %v1004 = vunpack.c.h.b16 %v274
    %v1005 = vunpack.c.l.b16 %v275
    %v1006 = vunpack.c.h.b16 %v275
    %v1007 = vunpack.c.l.b16 %v276
    %v1008 = vunpack.c.h.b16 %v276
    %v1009 = vunpack.c.l.b16 %v277
    %v1010 = vunpack.c.h.b16 %v277
    %v1011 = vunpack.c.l.b16 %v278
    %v1012 = vunpack.c.h.b16 %v278
    %v1013 = vunpack.c.l.b16 %v279
    %v1014 = vunpack.c.h.b16 %v279
    %v1015 = vunpack.c.l.b16 %v280
    %v1016 = vunpack.c.h.b16 %v280
    %v1017 = vunpack.c.l.b16 %v281
    %v1018 = vunpack.c.h.b16 %v281
    %v1019 = vunpack.c.l.b16 %v282
    %v1020 = vunpack.c.h.b16 %v282
    %v1021 = vunpack.c.l.b16 %v283
    %v1022 = vunpack.c.h.b16 %v283
    %v1023 = vunpack.c.l.b16 %v284
    %v1024 = vunpack.c.h.b16 %v284
    %v1025 = vunpack.c.l.b16 %v285
    %v1026 = vunpack.c.h.b16 %v285
    %v1027 = vunpack.c.l.b16 %v286
    %v1028 = vunpack.c.h.b16 %v286
    %v1029 = vunpack.c.l.b16 %v287
    %v1030 = vunpack.c.h.b16 %v287
    %v1031 = vunpack.c.l.b16 %v288
    %v1032 = vunpack.c.h.b16 %v288
    %v1033 = vunpack.c.l.b16 %v289
    %v1034 = vunpack.c.h.b16 %v289
    %v1035 = vunpack.c.l.b16 %v290
    %v1036 = vunpack.c.h.b16 %v290
    %v1037 = vunpack.c.l.b16 %v291
    %v1038 = vunpack.c.h.b16 %v291
    %v1039 = vunpack.c.l.b16 %v292
    %v1040 = vunpack.c.h.b16 %v292
    %v1041 = vunpack.c.l.b16 %v293
    %v1042 = vunpack.c.h.b16 %v293
    %v1043 = vunpack.c.l.b16 %v294
    %v1044 = vunpack.c.h.b16 %v294
    %v1045 = vunpack.c.l.b16 %v295
    %v1046 = vunpack.c.h.b16 %v295
    %v1047 = vunpack.c.l.b16 %v296
    %v1048 = vunpack.c.h.b16 %v296
    %v1049 = vunpack.c.l.b16 %v297
    %v1050 = vunpack.c.h.b16 %v297
    %v1051 = vunpack.c.l.b16 %v298
    %v1052 = vunpack.c.h.b16 %v298
    %v1053 = vunpack.c.l.b16 %v299
    %v1054 = vunpack.c.h.b16 %v299
    %v1055 = vunpack.c.l.b16 %v300
    %v1056 = vunpack.c.h.b16 %v300
    %v1057 = vunpack.c.l.b16 %v301
    %v1058 = vunpack.c.h.b16 %v301
    %v1059 = vunpack.c.l.b16 %v302
    %v1060 = vunpack.c.h.b16 %v302
    %v1061 = vunpack.c.l.b16 %v303
    %v1062 = vunpack.c.h.b16 %v303
    %v1063 = vunpack.c.l.b16 %v304
    %v1064 = vunpack.c.h.b16 %v304
    %v1065 = vunpack.c.l.b16 %v305
    %v1066 = vunpack.c.h.b16 %v305
    %v1067 = vunpack.c.l.b16 %v306
    %v1068 = vunpack.c.h.b16 %v306
    %v1069 = vunpack.c.l.b16 %v307
    %v1070 = vunpack.c.h.b16 %v307
    %v1071 = vunpack.c.l.b16 %v308
    %v1072 = vunpack.c.h.b16 %v308
    %v1073 = vunpack.c.l.b16 %v309
    %v1074 = vunpack.c.h.b16 %v309
    %v1075 = vunpack.c.l.b16 %v310
    %v1076 = vunpack.c.h.b16 %v310
    %v1077 = vunpack.c.l.b16 %v311
    %v1078 = vunpack.c.h.b16 %v311
    %v1079 = vunpack.c.l.b16 %v312
    %v1080 = vunpack.c.h.b16 %v312
    %v1081 = vunpack.c.l.b16 %v313
    %v1082 = vunpack.c.h.b16 %v313
    %v1083 = vunpack.c.l.b16 %v314
    %v1084 = vunpack.c.h.b16 %v314
    %v1085 = vunpack.c.l.b16 %v315
    %v1086 = vunpack.c.h.b16 %v315
    %v1087 = vunpack.c.l.b16 %v316
    %v1088 = vunpack.c.h.b16 %v316
    %v1089 = vunpack.c.l.b16 %v317
    %v1090 = vunpack.c.h.b16 %v317
    %v1091 = vunpack.c.l.b16 %v318
    %v1092 = vunpack.c.h.b16 %v318
    %v1093 = vunpack.c.l.b16 %v319
    %v1094 = vunpack.c.h.b16 %v319
    %v1095 = vunpack.c.l.b16 %v320
    %v1096 = vunpack.c.h.b16 %v320
    %v1097 = vunpack.c.l.b16 %v321
    %v1098 = vunpack.c.h.b16 %v321
    %v1099 = vunpack.c.l.b16 %v322
    %v1100 = vunpack.c.h.b16 %v322
    %v1101 = vunpack.c.l.b16 %v323
    %v1102 = vunpack.c.h.b16 %v323
    %v1103 = vunpack.c.l.b16 %v324
    %v1104 = vunpack.c.h.b16 %v324
    %v1105 = vunpack.c.l.b16 %v325
    %v1106 = vunpack.c.h.b16 %v325
    %v1107 = vunpack.c.l.b16 %v326
    %v1108 = vunpack.c.h.b16 %v326
    %v1109 = vunpack.c.l.b16 %v327
    %v1110 = vunpack.c.h.b16 %v327
    %v1111 = vunpack.c.l.b16 %v328
    %v1112 = vunpack.c.h.b16 %v328
    %v1113 = vunpack.c.l.b16 %v329
    %v1114 = vunpack.c.h.b16 %v329
    %v1115 = vunpack.c.l.b16 %v330
    %v1116 = vunpack.c.h.b16 %v330
    %v1117 = vunpack.c.l.b16 %v331
    %v1118 = vunpack.c.h.b16 %v331
    %v1119 = vunpack.c.l.b16 %v332
    %v1120 = vunpack.c.h.b16 %v332
    %v1121 = vunpack.c.l.b16 %v333
    %v1122 = vunpack.c.h.b16 %v333
    %v1123 = vunpack.c.l.b16 %v334
    %v1124 = vunpack.c.h.b16 %v334
    %v1125 = vunpack.c.l.b16 %v335
    %v1126 = vunpack.c.h.b16 %v335
    %v1127 = vunpack.c.l.b16 %v336
    %v1128 = vunpack.c.h.b16 %v336
    %v1129 = vunpack.c.l.b16 %v337
    %v1130 = vunpack.c.h.b16 %v337
    %v1131 = vunpack.c.l.b16 %v338
    %v1132 = vunpack.c.h.b16 %v338
    %v1133 = vunpack.c.l.b16 %v339
    %v1134 = vunpack.c.h.b16 %v339
    %v1135 = vunpack.c.l.b16 %v340
    %v1136 = vunpack.c.h.b16 %v340
    %v1137 = vunpack.c.l.b16 %v341
    %v1138 = vunpack.c.h.b16 %v341
    %v1139 = vunpack.c.l.b16 %v342
    %v1140 = vunpack.c.h.b16 %v342
    %v1141 = vunpack.c.l.b16 %v343
    %v1142 = vunpack.c.h.b16 %v343
    %v1143 = vunpack.c.l.b16 %v344
    %v1144 = vunpack.c.h.b16 %v344
    %v1145 = vunpack.c.l.b16 %v345
    %v1146 = vunpack.c.h.b16 %v345
    %v1147 = vunpack.c.l.b16 %v346
    %v1148 = vunpack.c.h.b16 %v346
    %v1149 = vunpack.c.l.b16 %v347
    %v1150 = vunpack.c.h.b16 %v347
    %v1151 = vunpack.c.l.b16 %v348
    %v1152 = vunpack.c.h.b16 %v348
    %v1153 = vunpack.c.l.b16 %v349
    %v1154 = vunpack.c.h.b16 %v349
    %v1155 = vunpack.c.l.b16 %v350
    %v1156 = vunpack.c.h.b16 %v350
    %v1157 = vunpack.c.l.b16 %v351
    %v1158 = vunpack.c.h.b16 %v351
    %v1159 = vunpack.c.l.b16 %v352
    %v1160 = vunpack.c.h.b16 %v352
    %v1161 = vpack.c.b16 %v653, %v649
    %v1162 = vpack.c.b16 %v654, %v650
    %v1163 = vpack.c.b16 %v655, %v651
    %v1164 = vpack.c.b16 %v656, %v652
    %v1165 = vpack.c.b16 %v661, %v657
    %v1166 = vpack.c.b16 %v662, %v658
    %v1167 = vpack.c.b16 %v663, %v659
    %v1168 = vpack.c.b16 %v664, %v660
    %v1169 = vpack.c.b16 %v669, %v665
    %v1170 = vpack.c.b16 %v670, %v666
    %v1171 = vpack.c.b16 %v671, %v667
    %v1172 = vpack.c.b16 %v672, %v668
    %v1173 = vpack.c.b16 %v677, %v673
    %v1174 = vpack.c.b16 %v678, %v674
    %v1175 = vpack.c.b16 %v679, %v675
    %v1176 = vpack.c.b16 %v680, %v676
    %v1177 = vpack.c.b16 %v685, %v681
    %v1178 = vpack.c.b16 %v686, %v682
    %v1179 = vpack.c.b16 %v687, %v683
    %v1180 = vpack.c.b16 %v688, %v684
    %v1181 = vpack.c.b16 %v693, %v689
    %v1182 = vpack.c.b16 %v694, %v690
    %v1183 = vpack.c.b16 %v695, %v691
    %v1184 = vpack.c.b16 %v696, %v692
    %v1185 = vpack.c.b16 %v701, %v697
    %v1186 = vpack.c.b16 %v702, %v698
    %v1187 = vpack.c.b16 %v703, %v699
    %v1188 = vpack.c.b16 %v704, %v700
    %v1189 = vpack.c.b16 %v709, %v705
    %v1190 = vpack.c.b16 %v710, %v706
    %v1191 = vpack.c.b16 %v711, %v707
    %v1192 = vpack.c.b16 %v712, %v708
    %v1193 = vpack.c.b16 %v717, %v713
    %v1194 = vpack.c.b16 %v718, %v714
    %v1195 = vpack.c.b16 %v719, %v715
    %v1196 = vpack.c.b16 %v720, %v716
    %v1197 = vpack.c.b16 %v725, %v721
    %v1198 = vpack.c.b16 %v726, %v722
    %v1199 = vpack.c.b16 %v727, %v723
    %v1200 = vpack.c.b16 %v728, %v724
    %v1201 = vpack.c.b16 %v733, %v729
    %v1202 = vpack.c.b16 %v734, %v730
    %v1203 = vpack.c.b16 %v735, %v731
    %v1204 = vpack.c.b16 %v736, %v732
    %v1205 = vpack.c.b16 %v741, %v737
    %v1206 = vpack.c.b16 %v742, %v738
    %v1207 = vpack.c.b16 %v743, %v739
    %v1208 = vpack.c.b16 %v744, %v740
    %v1209 = vpack.c.b16 %v749, %v745
    %v1210 = vpack.c.b16 %v750, %v746
    %v1211 = vpack.c.b16 %v751, %v747
    %v1212 = vpack.c.b16 %v752, %v748
    %v1213 = vpack.c.b16 %v757, %v753
    %v1214 = vpack.c.b16 %v758, %v754
    %v1215 = vpack.c.b16 %v759, %v755
    %v1216 = vpack.c.b16 %v760, %v756
    %v1217 = vpack.c.b16 %v765, %v761
    %v1218 = vpack.c.b16 %v766, %v762
    %v1219 = vpack.c.b16 %v767, %v763
    %v1220 = vpack.c.b16 %v768, %v764
    %v1221 = vpack.c.b16 %v773, %v769
    %v1222 = vpack.c.b16 %v774, %v770
    %v1223 = vpack.c.b16 %v775, %v771
    %v1224 = vpack.c.b16 %v776, %v772
    %v1225 = vpack.c.b16 %v781, %v777
    %v1226 = vpack.c.b16 %v782, %v778
    %v1227 = vpack.c.b16 %v783, %v779
    %v1228 = vpack.c.b16 %v784, %v780
    %v1229 = vpack.c.b16 %v789, %v785
    %v1230 = vpack.c.b16 %v790, %v786
    %v1231 = vpack.c.b16 %v791, %v787
    %v1232 = vpack.c.b16 %v792, %v788
    %v1233 = vpack.c.b16 %v797, %v793
    %v1234 = vpack.c.b16 %v798, %v794
    %v1235 = vpack.c.b16 %v799, %v795
    %v1236 = vpack.c.b16 %v800, %v796
    %v1237 = vpack.c.b16 %v805, %v801
    %v1238 = vpack.c.b16 %v806, %v802
    %v1239 = vpack.c.b16 %v807, %v803
    %v1240 = vpack.c.b16 %v808, %v804
    %v1241 = vpack.c.b16 %v813, %v809
    %v1242 = vpack.c.b16 %v814, %v810
    %v1243 = vpack.c.b16 %v815, %v811
    %v1244 = vpack.c.b16 %v816, %v812
    %v1245 = vpack.c.b16 %v821, %v817
    %v1246 = vpack.c.b16 %v822, %v818
    %v1247 = vpack.c.b16 %v823, %v819
    %v1248 = vpack.c.b16 %v824, %v820
    %v1249 = vpack.c.b16 %v829, %v825
    %v1250 = vpack.c.b16 %v830, %v826
    %v1251 = vpack.c.b16 %v831, %v827
    %v1252 = vpack.c.b16 %v832, %v828
    %v1253 = vpack.c.b16 %v837, %v833
    %v1254 = vpack.c.b16 %v838, %v834
    %v1255 = vpack.c.b16 %v839, %v835
    %v1256 = vpack.c.b16 %v840, %v836
    %v1257 = vpack.c.b16 %v845, %v841
    %v1258 = vpack.c.b16 %v846, %v842
    %v1259 = vpack.c.b16 %v847, %v843
    %v1260 = vpack.c.b16 %v848, %v844
    %v1261 = vpack.c.b16 %v853, %v849
    %v1262 = vpack.c.b16 %v854, %v850
    %v1263 = vpack.c.b16 %v855, %v851
    %v1264 = vpack.c.b16 %v856, %v852
    %v1265 = vpack.c.b16 %v861, %v857
    %v1266 = vpack.c.b16 %v862, %v858
    %v1267 = vpack.c.b16 %v863, %v859
    %v1268 = vpack.c.b16 %v864, %v860
    %v1269 = vpack.c.b16 %v869, %v865
    %v1270 = vpack.c.b16 %v870, %v866
    %v1271 = vpack.c.b16 %v871, %v867
    %v1272 = vpack.c.b16 %v872, %v868
    %v1273 = vpack.c.b16 %v877, %v873
    %v1274 = vpack.c.b16 %v878, %v874
    %v1275 = vpack.c.b16 %v879, %v875
    %v1276 = vpack.c.b16 %v880, %v876
    %v1277 = vpack.c.b16 %v885, %v881
    %v1278 = vpack.c.b16 %v886, %v882
    %v1279 = vpack.c.b16 %v887, %v883
    %v1280 = vpack.c.b16 %v888, %v884
    %v1281 = vpack.c.b16 %v893, %v889
    %v1282 = vpack.c.b16 %v894, %v890
    %v1283 = vpack.c.b16 %v895, %v891
    %v1284 = vpack.c.b16 %v896, %v892
    %v1285 = vpack.c.b16 %v901, %v897
    %v1286 = vpack.c.b16 %v902, %v898
    %v1287 = vpack.c.b16 %v903, %v899
    %v1288 = vpack.c.b16 %v904, %v900
    %v1289 = vpack.c.b16 %v909, %v905
    %v1290 = vpack.c.b16 %v910, %v906
    %v1291 = vpack.c.b16 %v911, %v907
    %v1292 = vpack.c.b16 %v912, %v908
    %v1293 = vpack.c.b16 %v917, %v913
    %v1294 = vpack.c.b16 %v918, %v914
    %v1295 = vpack.c.b16 %v919, %v915
    %v1296 = vpack.c.b16 %v920, %v916
    %v1297 = vpack.c.b16 %v925, %v921
    %v1298 = vpack.c.b16 %v926, %v922
    %v1299 = vpack.c.b16 %v927, %v923
    %v1300 = vpack.c.b16 %v928, %v924
    %v1301 = vpack.c.b16 %v933, %v929
    %v1302 = vpack.c.b16 %v934, %v930
    %v1303 = vpack.c.b16 %v935, %v931
    %v1304 = vpack.c.b16 %v936, %v932
    %v1305 = vpack.c.b16 %v941, %v937
    %v1306 = vpack.c.b16 %v942, %v938
    %v1307 = vpack.c.b16 %v943, %v939
    %v1308 = vpack.c.b16 %v944, %v940
    %v1309 = vpack.c.b16 %v949, %v945
    %v1310 = vpack.c.b16 %v950, %v946
    %v1311 = vpack.c.b16 %v951, %v947
    %v1312 = vpack.c.b16 %v952, %v948
    %v1313 = vpack.c.b16 %v957, %v953
    %v1314 = vpack.c.b16 %v958, %v954
    %v1315 = vpack.c.b16 %v959, %v955
    %v1316 = vpack.c.b16 %v960, %v956
    %v1317 = vpack.c.b16 %v965, %v961
    %v1318 = vpack.c.b16 %v966, %v962
    %v1319 = vpack.c.b16 %v967, %v963
    %v1320 = vpack.c.b16 %v968, %v964
    %v1321 = vpack.c.b16 %v973, %v969
    %v1322 = vpack.c.b16 %v974, %v970
    %v1323 = vpack.c.b16 %v975, %v971
    %v1324 = vpack.c.b16 %v976, %v972
    %v1325 = vpack.c.b16 %v981, %v977
    %v1326 = vpack.c.b16 %v982, %v978
    %v1327 = vpack.c.b16 %v983, %v979
    %v1328 = vpack.c.b16 %v984, %v980
    %v1329 = vpack.c.b16 %v989, %v985
    %v1330 = vpack.c.b16 %v990, %v986
    %v1331 = vpack.c.b16 %v991, %v987
    %v1332 = vpack.c.b16 %v992, %v988
    %v1333 = vpack.c.b16 %v997, %v993
    %v1334 = vpack.c.b16 %v998, %v994
    %v1335 = vpack.c.b16 %v999, %v995
    %v1336 = vpack.c.b16 %v1000, %v996
    %v1337 = vpack.c.b16 %v1005, %v1001
    %v1338 = vpack.c.b16 %v1006, %v1002
    %v1339 = vpack.c.b16 %v1007, %v1003
    %v1340 = vpack.c.b16 %v1008, %v1004
    %v1341 = vpack.c.b16 %v1013, %v1009
    %v1342 = vpack.c.b16 %v1014, %v1010
    %v1343 = vpack.c.b16 %v1015, %v1011
    %v1344 = vpack.c.b16 %v1016, %v1012
    %v1345 = vpack.c.b16 %v1021, %v1017
    %v1346 = vpack.c.b16 %v1022, %v1018
    %v1347 = vpack.c.b16 %v1023, %v1019
    %v1348 = vpack.c.b16 %v1024, %v1020
    %v1349 = vpack.c.b16 %v1029, %v1025
    %v1350 = vpack.c.b16 %v1030, %v1026
    %v1351 = vpack.c.b16 %v1031, %v1027
    %v1352 = vpack.c.b16 %v1032, %v1028
    %v1353 = vpack.c.b16 %v1037, %v1033
    %v1354 = vpack.c.b16 %v1038, %v1034
    %v1355 = vpack.c.b16 %v1039, %v1035
    %v1356 = vpack.c.b16 %v1040, %v1036
    %v1357 = vpack.c.b16 %v1045, %v1041
    %v1358 = vpack.c.b16 %v1046, %v1042
    %v1359 = vpack.c.b16 %v1047, %v1043
    %v1360 = vpack.c.b16 %v1048, %v1044
    %v1361 = vpack.c.b16 %v1053, %v1049
    %v1362 = vpack.c.b16 %v1054, %v1050
    %v1363 = vpack.c.b16 %v1055, %v1051
    %v1364 = vpack.c.b16 %v1056, %v1052
    %v1365 = vpack.c.b16 %v1061, %v1057
    %v1366 = vpack.c.b16 %v1062, %v1058
    %v1367 = vpack.c.b16 %v1063, %v1059
    %v1368 = vpack.c.b16 %v1064, %v1060
    %v1369 = vpack.c.b16 %v1069, %v1065
    %v1370 = vpack.c.b16 %v1070, %v1066
    %v1371 = vpack.c.b16 %v1071, %v1067
    %v1372 = vpack.c.b16 %v1072, %v1068
    %v1373 = vpack.c.b16 %v1077, %v1073
    %v1374 = vpack.c.b16 %v1078, %v1074
    %v1375 = vpack.c.b16 %v1079, %v1075
    %v1376 = vpack.c.b16 %v1080, %v1076
    %v1377 = vpack.c.b16 %v1085, %v1081
    %v1378 = vpack.c.b16 %v1086, %v1082
    %v1379 = vpack.c.b16 %v1087, %v1083
    %v1380 = vpack.c.b16 %v1088, %v1084
    %v1381 = vpack.c.b16 %v1093, %v1089
    %v1382 = vpack.c.b16 %v1094, %v1090
    %v1383 = vpack.c.b16 %v1095, %v1091
    %v1384 = vpack.c.b16 %v1096, %v1092
    %v1385 = vpack.c.b16 %v1101, %v1097
    %v1386 = vpack.c.b16 %v1102, %v1098
    %v1387 = vpack.c.b16 %v1103, %v1099
    %v1388 = vpack.c.b16 %v1104, %v1100
    %v1389 = vpack.c.b16 %v1109, %v1105
    %v1390 = vpack.c.b16 %v1110, %v1106
    %v1391 = vpack.c.b16 %v1111, %v1107
    %v1392 = vpack.c.b16 %v1112, %v1108
    %v1393 = vpack.c.b16 %v1117, %v1113
    %v1394 = vpack.c.b16 %v1118, %v1114
    %v1395 = vpack.c.b16 %v1119, %v1115
    %v1396 = vpack.c.b16 %v1120, %v1116
    %v1397 = vpack.c.b16 %v1125, %v1121
    %v1398 = vpack.c.b16 %v1126, %v1122
    %v1399 = vpack.c.b16 %v1127, %v1123
    %v1400 = vpack.c.b16 %v1128, %v1124
    %v1401 = vpack.c.b16 %v1133, %v1129
    %v1402 = vpack.c.b16 %v1134, %v1130
    %v1403 = vpack.c.b16 %v1135, %v1131
    %v1404 = vpack.c.b16 %v1136, %v1132
    %v1405 = vpack.c.b16 %v1141, %v1137
    %v1406 = vpack.c.b16 %v1142, %v1138
    %v1407 = vpack.c.b16 %v1143, %v1139
    %v1408 = vpack.c.b16 %v1144, %v1140
    %v1409 = vpack.c.b16 %v1149, %v1145
    %v1410 = vpack.c.b16 %v1150, %v1146
    %v1411 = vpack.c.b16 %v1151, %v1147
    %v1412 = vpack.c.b16 %v1152, %v1148
    %v1413 = vpack.c.b16 %v1157, %v1153
    %v1414 = vpack.c.b16 %v1158, %v1154
    %v1415 = vpack.c.b16 %v1159, %v1155
    %v1416 = vpack.c.b16 %v1160, %v1156
    %1673 = vmatprep.subr.bf16.mxu0 %v1162
    %1674 = vmatpush1.bf16.msra.mxu0 %v1161
    %1675 = vmatprep.subr.bf16.mxu0 %v1166
    %1676 = vmatpush1.bf16.msra.mxu0 %v1165
    %1677 = vmatprep.subr.bf16.mxu0 %v1170
    %1678 = vmatpush1.bf16.msra.mxu0 %v1169
    %1679 = vmatprep.subr.bf16.mxu0 %v1174
    %1680 = vmatpush1.bf16.msra.mxu0 %v1173
    %1681 = vmatprep.subr.bf16.mxu0 %v1178
    %1682 = vmatpush1.bf16.msra.mxu0 %v1177
    %1683 = vmatprep.subr.bf16.mxu0 %v1182
    %1684 = vmatpush1.bf16.msra.mxu0 %v1181
    %1685 = vmatprep.subr.bf16.mxu0 %v1186
    %1686 = vmatpush1.bf16.msra.mxu0 %v1185
    %1687 = vmatprep.subr.bf16.mxu0 %v1190
    %1688 = vmatpush1.bf16.msra.mxu0 %v1189
    %1689 = vmatprep.subr.bf16.mxu0 %v1194
    %1690 = vmatpush1.bf16.msra.mxu0 %v1193
    %1691 = vmatprep.subr.bf16.mxu0 %v1198
    %1692 = vmatpush1.bf16.msra.mxu0 %v1197
    %1693 = vmatprep.subr.bf16.mxu0 %v1202
    %1694 = vmatpush1.bf16.msra.mxu0 %v1201
    %1695 = vmatprep.subr.bf16.mxu0 %v1206
    %1696 = vmatpush1.bf16.msra.mxu0 %v1205
    %1697 = vmatprep.subr.bf16.mxu0 %v1210
    %1698 = vmatpush1.bf16.msra.mxu0 %v1209
    %1699 = vmatprep.subr.bf16.mxu0 %v1214
    %1700 = vmatpush1.bf16.msra.mxu0 %v1213
    %1701 = vmatprep.subr.bf16.mxu0 %v1218
    %1702 = vmatpush1.bf16.msra.mxu0 %v1217
    %1703 = vmatprep.subr.bf16.mxu0 %v1222
    %1704 = vmatpush1.bf16.msra.mxu0 %v1221
    %1705 = vmatprep.mubr.bf16.mxu0 %v378
    %1706 = vmatmul.mubr.bf16.gmra.mrb[0].mxu0 %v377
    %v1707 = vpop.f32.mrb[0].mxu0
    %v1708 = vadd.f32 0.0, %v1707
    %v1709 = vpop.f32.mrb[0].mxu0
    %v1710 = vadd.f32 0.0, %v1709
    %v1711 = vpop.f32.mrb[0].mxu0
    %v1712 = vadd.f32 0.0, %v1711
    %v1713 = vpop.f32.mrb[0].mxu0
    %v1714 = vadd.f32 0.0, %v1713
    %1715 = vdwg.mxu0
    %1716 = vmatprep.subr.bf16.mxu0 %v1226
    %1717 = vmatpush1.bf16.msra.mxu0 %v1225
    %1718 = vmatprep.subr.bf16.mxu0 %v1230
    %1719 = vmatpush1.bf16.msra.mxu0 %v1229
    %1720 = vmatprep.subr.bf16.mxu0 %v1234
    %1721 = vmatpush1.bf16.msra.mxu0 %v1233
    %1722 = vmatprep.subr.bf16.mxu0 %v1238
    %1723 = vmatpush1.bf16.msra.mxu0 %v1237
    %1724 = vmatprep.subr.bf16.mxu0 %v1242
    %1725 = vmatpush1.bf16.msra.mxu0 %v1241
    %1726 = vmatprep.subr.bf16.mxu0 %v1246
    %1727 = vmatpush1.bf16.msra.mxu0 %v1245
    %1728 = vmatprep.subr.bf16.mxu0 %v1250
    %1729 = vmatpush1.bf16.msra.mxu0 %v1249
    %1730 = vmatprep.subr.bf16.mxu0 %v1254
    %1731 = vmatpush1.bf16.msra.mxu0 %v1253
    %1732 = vmatprep.subr.bf16.mxu0 %v1258
    %1733 = vmatpush1.bf16.msra.mxu0 %v1257
    %1734 = vmatprep.subr.bf16.mxu0 %v1262
    %1735 = vmatpush1.bf16.msra.mxu0 %v1261
    %1736 = vmatprep.subr.bf16.mxu0 %v1266
    %1737 = vmatpush1.bf16.msra.mxu0 %v1265
    %1738 = vmatprep.subr.bf16.mxu0 %v1270
    %1739 = vmatpush1.bf16.msra.mxu0 %v1269
    %1740 = vmatprep.subr.bf16.mxu0 %v1274
    %1741 = vmatpush1.bf16.msra.mxu0 %v1273
    %1742 = vmatprep.subr.bf16.mxu0 %v1278
    %1743 = vmatpush1.bf16.msra.mxu0 %v1277
    %1744 = vmatprep.subr.bf16.mxu0 %v1282
    %1745 = vmatpush1.bf16.msra.mxu0 %v1281
    %1746 = vmatprep.subr.bf16.mxu0 %v1286
    %1747 = vmatpush1.bf16.msra.mxu0 %v1285
    %1748 = vmatprep.mubr.bf16.mxu0 %v380
    %1749 = vmatmul.mubr.bf16.gmra.mrb[0].mxu0 %v379
    %v1750 = vpop.f32.mrb[0].mxu0
    %v1751 = vadd.f32 %v1708, %v1750
    %v1752 = vpop.f32.mrb[0].mxu0
    %v1753 = vadd.f32 %v1710, %v1752
    %v1754 = vpop.f32.mrb[0].mxu0
    %v1755 = vadd.f32 %v1712, %v1754
    %v1756 = vpop.f32.mrb[0].mxu0
    %v1757 = vadd.f32 %v1714, %v1756
    %1758 = vdwg.mxu0
    %1759 = vmatprep.subr.bf16.mxu0 %v1290
    %1760 = vmatpush1.bf16.msra.mxu0 %v1289
    %1761 = vmatprep.subr.bf16.mxu0 %v1294
    %1762 = vmatpush1.bf16.msra.mxu0 %v1293
    %1763 = vmatprep.subr.bf16.mxu0 %v1298
    %1764 = vmatpush1.bf16.msra.mxu0 %v1297
    %1765 = vmatprep.subr.bf16.mxu0 %v1302
    %1766 = vmatpush1.bf16.msra.mxu0 %v1301
    %1767 = vmatprep.subr.bf16.mxu0 %v1306
    %1768 = vmatpush1.bf16.msra.mxu0 %v1305
    %1769 = vmatprep.subr.bf16.mxu0 %v1310
    %1770 = vmatpush1.bf16.msra.mxu0 %v1309
    %1771 = vmatprep.subr.bf16.mxu0 %v1314
    %1772 = vmatpush1.bf16.msra.mxu0 %v1313
    %1773 = vmatprep.subr.bf16.mxu0 %v1318
    %1774 = vmatpush1.bf16.msra.mxu0 %v1317
    %1775 = vmatprep.subr.bf16.mxu0 %v1322
    %1776 = vmatpush1.bf16.msra.mxu0 %v1321
    %1777 = vmatprep.subr.bf16.mxu0 %v1326
    %1778 = vmatpush1.bf16.msra.mxu0 %v1325
    %1779 = vmatprep.subr.bf16.mxu0 %v1330
    %1780 = vmatpush1.bf16.msra.mxu0 %v1329
    %1781 = vmatprep.subr.bf16.mxu0 %v1334
    %1782 = vmatpush1.bf16.msra.mxu0 %v1333
    %1783 = vmatprep.subr.bf16.mxu0 %v1338
    %1784 = vmatpush1.bf16.msra.mxu0 %v1337
    %1785 = vmatprep.subr.bf16.mxu0 %v1342
    %1786 = vmatpush1.bf16.msra.mxu0 %v1341
    %1787 = vmatprep.subr.bf16.mxu0 %v1346
    %1788 = vmatpush1.bf16.msra.mxu0 %v1345
    %1789 = vmatprep.subr.bf16.mxu0 %v1350
    %1790 = vmatpush1.bf16.msra.mxu0 %v1349
    %1791 = vmatprep.mubr.bf16.mxu0 %v382
    %1792 = vmatmul.mubr.bf16.gmra.mrb[0].mxu0 %v381
    %v1793 = vpop.f32.mrb[0].mxu0
    %v1794 = vadd.f32 %v1751, %v1793
    %v1795 = vpop.f32.mrb[0].mxu0
    %v1796 = vadd.f32 %v1753, %v1795
    %v1797 = vpop.f32.mrb[0].mxu0
    %v1798 = vadd.f32 %v1755, %v1797
    %v1799 = vpop.f32.mrb[0].mxu0
    %v1800 = vadd.f32 %v1757, %v1799
    %1801 = vdwg.mxu0
    %1802 = vmatprep.subr.bf16.mxu0 %v1354
    %1803 = vmatpush1.bf16.msra.mxu0 %v1353
    %1804 = vmatprep.subr.bf16.mxu0 %v1358
    %1805 = vmatpush1.bf16.msra.mxu0 %v1357
    %1806 = vmatprep.subr.bf16.mxu0 %v1362
    %1807 = vmatpush1.bf16.msra.mxu0 %v1361
    %1808 = vmatprep.subr.bf16.mxu0 %v1366
    %1809 = vmatpush1.bf16.msra.mxu0 %v1365
    %1810 = vmatprep.subr.bf16.mxu0 %v1370
    %1811 = vmatpush1.bf16.msra.mxu0 %v1369
    %1812 = vmatprep.subr.bf16.mxu0 %v1374
    %1813 = vmatpush1.bf16.msra.mxu0 %v1373
    %1814 = vmatprep.subr.bf16.mxu0 %v1378
    %1815 = vmatpush1.bf16.msra.mxu0 %v1377
    %1816 = vmatprep.subr.bf16.mxu0 %v1382
    %1817 = vmatpush1.bf16.msra.mxu0 %v1381
    %1818 = vmatprep.subr.bf16.mxu0 %v1386
    %1819 = vmatpush1.bf16.msra.mxu0 %v1385
    %1820 = vmatprep.subr.bf16.mxu0 %v1390
    %1821 = vmatpush1.bf16.msra.mxu0 %v1389
    %1822 = vmatprep.subr.bf16.mxu0 %v1394
    %1823 = vmatpush1.bf16.msra.mxu0 %v1393
    %1824 = vmatprep.subr.bf16.mxu0 %v1398
    %1825 = vmatpush1.bf16.msra.mxu0 %v1397
    %1826 = vmatprep.subr.bf16.mxu0 %v1402
    %1827 = vmatpush1.bf16.msra.mxu0 %v1401
    %1828 = vmatprep.subr.bf16.mxu0 %v1406
    %1829 = vmatpush1.bf16.msra.mxu0 %v1405
    %1830 = vmatprep.subr.bf16.mxu0 %v1410
    %1831 = vmatpush1.bf16.msra.mxu0 %v1409
    %1832 = vmatprep.subr.bf16.mxu0 %v1414
    %1833 = vmatpush1.bf16.msra.mxu0 %v1413
    %1834 = vmatprep.mubr.bf16.mxu0 %v384
    %1835 = vmatmul.mubr.bf16.gmra.mrb[0].mxu0 %v383
    %v1836 = vpop.f32.mrb[0].mxu0
    %v1837 = vadd.f32 %v1794, %v1836
    %v1838 = vpop.f32.mrb[0].mxu0
    %v1839 = vadd.f32 %v1796, %v1838
    %v1840 = vpop.f32.mrb[0].mxu0
    %v1841 = vadd.f32 %v1798, %v1840
    %v1842 = vpop.f32.mrb[0].mxu0
    %v1843 = vadd.f32 %v1800, %v1842
    %1844 = vdwg.mxu0
    %1845 = vmatprep.subr.bf16.mxu0 %v1164
    %1846 = vmatpush1.bf16.msra.mxu0 %v1163
    %1847 = vmatprep.subr.bf16.mxu0 %v1168
    %1848 = vmatpush1.bf16.msra.mxu0 %v1167
    %1849 = vmatprep.subr.bf16.mxu0 %v1172
    %1850 = vmatpush1.bf16.msra.mxu0 %v1171
    %1851 = vmatprep.subr.bf16.mxu0 %v1176
    %1852 = vmatpush1.bf16.msra.mxu0 %v1175
    %1853 = vmatprep.subr.bf16.mxu0 %v1180
    %1854 = vmatpush1.bf16.msra.mxu0 %v1179
    %1855 = vmatprep.subr.bf16.mxu0 %v1184
    %1856 = vmatpush1.bf16.msra.mxu0 %v1183
    %1857 = vmatprep.subr.bf16.mxu0 %v1188
    %1858 = vmatpush1.bf16.msra.mxu0 %v1187
    %1859 = vmatprep.subr.bf16.mxu0 %v1192
    %1860 = vmatpush1.bf16.msra.mxu0 %v1191
    %1861 = vmatprep.subr.bf16.mxu0 %v1196
    %1862 = vmatpush1.bf16.msra.mxu0 %v1195
    %1863 = vmatprep.subr.bf16.mxu0 %v1200
    %1864 = vmatpush1.bf16.msra.mxu0 %v1199
    %1865 = vmatprep.subr.bf16.mxu0 %v1204
    %1866 = vmatpush1.bf16.msra.mxu0 %v1203
    %1867 = vmatprep.subr.bf16.mxu0 %v1208
    %1868 = vmatpush1.bf16.msra.mxu0 %v1207
    %1869 = vmatprep.subr.bf16.mxu0 %v1212
    %1870 = vmatpush1.bf16.msra.mxu0 %v1211
    %1871 = vmatprep.subr.bf16.mxu0 %v1216
    %1872 = vmatpush1.bf16.msra.mxu0 %v1215
    %1873 = vmatprep.subr.bf16.mxu0 %v1220
    %1874 = vmatpush1.bf16.msra.mxu0 %v1219
    %1875 = vmatprep.subr.bf16.mxu0 %v1224
    %1876 = vmatpush1.bf16.msra.mxu0 %v1223
    %1877 = vmatprep.mubr.bf16.mxu0 %v378
    %1878 = vmatmul.mubr.bf16.gmra.mrb[0].mxu0 %v377
    %v1879 = vpop.f32.mrb[0].mxu0
    %v1880 = vadd.f32 0.0, %v1879
    %v1881 = vpop.f32.mrb[0].mxu0
    %v1882 = vadd.f32 0.0, %v1881
    %v1883 = vpop.f32.mrb[0].mxu0
    %v1884 = vadd.f32 0.0, %v1883
    %v1885 = vpop.f32.mrb[0].mxu0
    %v1886 = vadd.f32 0.0, %v1885
    %1887 = vdwg.mxu0
    %1888 = vmatprep.subr.bf16.mxu0 %v1228
    %1889 = vmatpush1.bf16.msra.mxu0 %v1227
    %1890 = vmatprep.subr.bf16.mxu0 %v1232
    %1891 = vmatpush1.bf16.msra.mxu0 %v1231
    %1892 = vmatprep.subr.bf16.mxu0 %v1236
    %1893 = vmatpush1.bf16.msra.mxu0 %v1235
    %1894 = vmatprep.subr.bf16.mxu0 %v1240
    %1895 = vmatpush1.bf16.msra.mxu0 %v1239
    %1896 = vmatprep.subr.bf16.mxu0 %v1244
    %1897 = vmatpush1.bf16.msra.mxu0 %v1243
    %1898 = vmatprep.subr.bf16.mxu0 %v1248
    %1899 = vmatpush1.bf16.msra.mxu0 %v1247
    %1900 = vmatprep.subr.bf16.mxu0 %v1252
    %1901 = vmatpush1.bf16.msra.mxu0 %v1251
    %1902 = vmatprep.subr.bf16.mxu0 %v1256
    %1903 = vmatpush1.bf16.msra.mxu0 %v1255
    %1904 = vmatprep.subr.bf16.mxu0 %v1260
    %1905 = vmatpush1.bf16.msra.mxu0 %v1259
    %1906 = vmatprep.subr.bf16.mxu0 %v1264
    %1907 = vmatpush1.bf16.msra.mxu0 %v1263
    %1908 = vmatprep.subr.bf16.mxu0 %v1268
    %1909 = vmatpush1.bf16.msra.mxu0 %v1267
    %1910 = vmatprep.subr.bf16.mxu0 %v1272
    %1911 = vmatpush1.bf16.msra.mxu0 %v1271
    %1912 = vmatprep.subr.bf16.mxu0 %v1276
    %1913 = vmatpush1.bf16.msra.mxu0 %v1275
    %1914 = vmatprep.subr.bf16.mxu0 %v1280
    %1915 = vmatpush1.bf16.msra.mxu0 %v1279
    %1916 = vmatprep.subr.bf16.mxu0 %v1284
    %1917 = vmatpush1.bf16.msra.mxu0 %v1283
    %1918 = vmatprep.subr.bf16.mxu0 %v1288
    %1919 = vmatpush1.bf16.msra.mxu0 %v1287
    %1920 = vmatprep.mubr.bf16.mxu0 %v380
    %1921 = vmatmul.mubr.bf16.gmra.mrb[0].mxu0 %v379
    %v1922 = vpop.f32.mrb[0].mxu0
    %v1923 = vadd.f32 %v1880, %v1922
    %v1924 = vpop.f32.mrb[0].mxu0
    %v1925 = vadd.f32 %v1882, %v1924
    %v1926 = vpop.f32.mrb[0].mxu0
    %v1927 = vadd.f32 %v1884, %v1926
    %v1928 = vpop.f32.mrb[0].mxu0
    %v1929 = vadd.f32 %v1886, %v1928
    %1930 = vdwg.mxu0
    %1931 = vmatprep.subr.bf16.mxu0 %v1292
    %1932 = vmatpush1.bf16.msra.mxu0 %v1291
    %1933 = vmatprep.subr.bf16.mxu0 %v1296
    %1934 = vmatpush1.bf16.msra.mxu0 %v1295
    %1935 = vmatprep.subr.bf16.mxu0 %v1300
    %1936 = vmatpush1.bf16.msra.mxu0 %v1299
    %1937 = vmatprep.subr.bf16.mxu0 %v1304
    %1938 = vmatpush1.bf16.msra.mxu0 %v1303
    %1939 = vmatprep.subr.bf16.mxu0 %v1308
    %1940 = vmatpush1.bf16.msra.mxu0 %v1307
    %1941 = vmatprep.subr.bf16.mxu0 %v1312
    %1942 = vmatpush1.bf16.msra.mxu0 %v1311
    %1943 = vmatprep.subr.bf16.mxu0 %v1316
    %1944 = vmatpush1.bf16.msra.mxu0 %v1315
    %1945 = vmatprep.subr.bf16.mxu0 %v1320
    %1946 = vmatpush1.bf16.msra.mxu0 %v1319
    %1947 = vmatprep.subr.bf16.mxu0 %v1324
    %1948 = vmatpush1.bf16.msra.mxu0 %v1323
    %1949 = vmatprep.subr.bf16.mxu0 %v1328
    %1950 = vmatpush1.bf16.msra.mxu0 %v1327
    %1951 = vmatprep.subr.bf16.mxu0 %v1332
    %1952 = vmatpush1.bf16.msra.mxu0 %v1331
    %1953 = vmatprep.subr.bf16.mxu0 %v1336
    %1954 = vmatpush1.bf16.msra.mxu0 %v1335
    %1955 = vmatprep.subr.bf16.mxu0 %v1340
    %1956 = vmatpush1.bf16.msra.mxu0 %v1339
    %1957 = vmatprep.subr.bf16.mxu0 %v1344
    %1958 = vmatpush1.bf16.msra.mxu0 %v1343
    %1959 = vmatprep.subr.bf16.mxu0 %v1348
    %1960 = vmatpush1.bf16.msra.mxu0 %v1347
    %1961 = vmatprep.subr.bf16.mxu0 %v1352
    %1962 = vmatpush1.bf16.msra.mxu0 %v1351
    %1963 = vmatprep.mubr.bf16.mxu0 %v382
    %1964 = vmatmul.mubr.bf16.gmra.mrb[0].mxu0 %v381
    %v1965 = vpop.f32.mrb[0].mxu0
    %v1966 = vadd.f32 %v1923, %v1965
    %v1967 = vpop.f32.mrb[0].mxu0
    %v1968 = vadd.f32 %v1925, %v1967
    %v1969 = vpop.f32.mrb[0].mxu0
    %v1970 = vadd.f32 %v1927, %v1969
    %v1971 = vpop.f32.mrb[0].mxu0
    %v1972 = vadd.f32 %v1929, %v1971
    %1973 = vdwg.mxu0
    %1974 = vmatprep.subr.bf16.mxu0 %v1356
    %1975 = vmatpush1.bf16.msra.mxu0 %v1355
    %1976 = vmatprep.subr.bf16.mxu0 %v1360
    %1977 = vmatpush1.bf16.msra.mxu0 %v1359
    %1978 = vmatprep.subr.bf16.mxu0 %v1364
    %1979 = vmatpush1.bf16.msra.mxu0 %v1363
    %1980 = vmatprep.subr.bf16.mxu0 %v1368
    %1981 = vmatpush1.bf16.msra.mxu0 %v1367
    %1982 = vmatprep.subr.bf16.mxu0 %v1372
    %1983 = vmatpush1.bf16.msra.mxu0 %v1371
    %1984 = vmatprep.subr.bf16.mxu0 %v1376
    %1985 = vmatpush1.bf16.msra.mxu0 %v1375
    %1986 = vmatprep.subr.bf16.mxu0 %v1380
    %1987 = vmatpush1.bf16.msra.mxu0 %v1379
    %1988 = vmatprep.subr.bf16.mxu0 %v1384
    %1989 = vmatpush1.bf16.msra.mxu0 %v1383
    %1990 = vmatprep.subr.bf16.mxu0 %v1388
    %1991 = vmatpush1.bf16.msra.mxu0 %v1387
    %1992 = vmatprep.subr.bf16.mxu0 %v1392
    %1993 = vmatpush1.bf16.msra.mxu0 %v1391
    %1994 = vmatprep.subr.bf16.mxu0 %v1396
    %1995 = vmatpush1.bf16.msra.mxu0 %v1395
    %1996 = vmatprep.subr.bf16.mxu0 %v1400
    %1997 = vmatpush1.bf16.msra.mxu0 %v1399
    %1998 = vmatprep.subr.bf16.mxu0 %v1404
    %1999 = vmatpush1.bf16.msra.mxu0 %v1403
    %2000 = vmatprep.subr.bf16.mxu0 %v1408
    %2001 = vmatpush1.bf16.msra.mxu0 %v1407
    %2002 = vmatprep.subr.bf16.mxu0 %v1412
    %2003 = vmatpush1.bf16.msra.mxu0 %v1411
    %2004 = vmatprep.subr.bf16.mxu0 %v1416
    %2005 = vmatpush1.bf16.msra.mxu0 %v1415
    %2006 = vmatprep.mubr.bf16.mxu0 %v384
    %2007 = vmatmul.mubr.bf16.gmra.mrb[0].mxu0 %v383
    %v2008 = vpop.f32.mrb[0].mxu0
    %v2009 = vadd.f32 %v1966, %v2008
    %v2010 = vpop.f32.mrb[0].mxu0
    %v2011 = vadd.f32 %v1968, %v2010
    %v2012 = vpop.f32.mrb[0].mxu0
    %v2013 = vadd.f32 %v1970, %v2012
    %v2014 = vpop.f32.mrb[0].mxu0
    %v2015 = vadd.f32 %v1972, %v2014
    %2016 = vdwg.mxu0
    %v2017 = vld [vmem:[%s2] sm:$0xf]
    %v2018 = vld [vmem:[%s3] sm:$0xf]
    %v2019 = vadd.f32 %v1837, %v1841
    %v2020 = vrot.slane %v2019, 4
    %v2021 = vadd.f32 %v2019, %v2020
    %v2022 = vrot.slane %v2021, 2
    %v2023 = vadd.f32 %v2021, %v2022
    %v2024 = vrot.slane %v2023, 1
    %v2025 = vadd.f32 %v2023, %v2024
    %v2026 = vadd.f32 %v1839, %v1843
    %v2027 = vrot.slane %v2026, 4
    %v2028 = vadd.f32 %v2026, %v2027
    %v2029 = vrot.slane %v2028, 2
    %v2030 = vadd.f32 %v2028, %v2029
    %v2031 = vrot.slane %v2030, 1
    %v2032 = vadd.f32 %v2030, %v2031
    %v2033 = vadd.f32 %v2009, %v2013
    %v2034 = vrot.slane %v2033, 4
    %v2035 = vadd.f32 %v2033, %v2034
    %v2036 = vrot.slane %v2035, 2
    %v2037 = vadd.f32 %v2035, %v2036
    %v2038 = vrot.slane %v2037, 1
    %v2039 = vadd.f32 %v2037, %v2038
    %v2040 = vadd.f32 %v2011, %v2015
    %v2041 = vrot.slane %v2040, 4
    %v2042 = vadd.f32 %v2040, %v2041
    %v2043 = vrot.slane %v2042, 2
    %v2044 = vadd.f32 %v2042, %v2043
    %v2045 = vrot.slane %v2044, 1
    %v2046 = vadd.f32 %v2044, %v2045
    %v2047 = vmul.f32 %v2025, 0.0625
    %v2048 = vmul.f32 %v2032, 0.0625
    %v2049 = vmul.f32 %v2039, 0.0625
    %v2050 = vmul.f32 %v2046, 0.0625
    %v2051 = vmul.f32 %v1837, %v1837
    %v2052 = vmul.f32 %v1839, %v1839
    %v2053 = vmul.f32 %v2009, %v2009
    %v2054 = vmul.f32 %v2011, %v2011
    %v2055 = vmul.f32 %v1841, %v1841
    %v2056 = vmul.f32 %v1843, %v1843
    %v2057 = vmul.f32 %v2013, %v2013
    %v2058 = vmul.f32 %v2015, %v2015
    %v2059 = vadd.f32 %v2051, %v2055
    %v2060 = vrot.slane %v2059, 4
    %v2061 = vadd.f32 %v2059, %v2060
    %v2062 = vrot.slane %v2061, 2
    %v2063 = vadd.f32 %v2061, %v2062
    %v2064 = vrot.slane %v2063, 1
    %v2065 = vadd.f32 %v2063, %v2064
    %v2066 = vadd.f32 %v2052, %v2056
    %v2067 = vrot.slane %v2066, 4
    %v2068 = vadd.f32 %v2066, %v2067
    %v2069 = vrot.slane %v2068, 2
    %v2070 = vadd.f32 %v2068, %v2069
    %v2071 = vrot.slane %v2070, 1
    %v2072 = vadd.f32 %v2070, %v2071
    %v2073 = vadd.f32 %v2053, %v2057
    %v2074 = vrot.slane %v2073, 4
    %v2075 = vadd.f32 %v2073, %v2074
    %v2076 = vrot.slane %v2075, 2
    %v2077 = vadd.f32 %v2075, %v2076
    %v2078 = vrot.slane %v2077, 1
    %v2079 = vadd.f32 %v2077, %v2078
    %v2080 = vadd.f32 %v2054, %v2058
    %v2081 = vrot.slane %v2080, 4
    %v2082 = vadd.f32 %v2080, %v2081
    %v2083 = vrot.slane %v2082, 2
    %v2084 = vadd.f32 %v2082, %v2083
    %v2085 = vrot.slane %v2084, 1
    %v2086 = vadd.f32 %v2084, %v2085
    %v2087 = vmul.f32 %v2065, 0.0625
    %v2088 = vmul.f32 %v2072, 0.0625
    %v2089 = vmul.f32 %v2079, 0.0625
    %v2090 = vmul.f32 %v2086, 0.0625
    %v2091 = vmul.f32 %v2047, %v2047
    %v2092 = vmul.f32 %v2048, %v2048
    %v2093 = vmul.f32 %v2049, %v2049
    %v2094 = vmul.f32 %v2050, %v2050
    %v2095 = vsub.f32 %v2087, %v2091
    %v2096 = vsub.f32 %v2088, %v2092
    %v2097 = vsub.f32 %v2089, %v2093
    %v2098 = vsub.f32 %v2090, %v2094
    %v2099 = vadd.f32 %v2095, 1e-05
    %v2100 = vadd.f32 %v2096, 1e-05
    %v2101 = vadd.f32 %v2097, 1e-05
    %v2102 = vadd.f32 %v2098, 1e-05
    %v2103 = vrsqrt.pop %v2099
    %v2104 = vrsqrt.pop %v2100
    %v2105 = vrsqrt.pop %v2101
    %v2106 = vrsqrt.pop %v2102
    %v2108 = vlaneseq
    %v2109 = vshrl.u32 %v2108, 7
    %v2110 = vsub.s32 0, %v2109
    %v2111 = vrot.slane %v2017, %v2110
    %v2112 = vlaneseq
    %v2113 = vshrl.u32 %v2112, 7
    %v2114 = vsub.s32 1, %v2113
    %v2115 = vrot.slane %v2017, %v2114
    %v2116 = vlaneseq
    %v2117 = vshrl.u32 %v2116, 7
    %v2118 = vsub.s32 2, %v2117
    %v2119 = vrot.slane %v2017, %v2118
    %v2120 = vlaneseq
    %v2121 = vshrl.u32 %v2120, 7
    %v2122 = vsub.s32 3, %v2121
    %v2123 = vrot.slane %v2017, %v2122
    %v2128 = vmul.f32 %v2103, %v2111
    %v2129 = vmul.f32 %v2104, %v2115
    %v2130 = vmul.f32 %v2105, %v2119
    %v2131 = vmul.f32 %v2106, %v2123
    %v2132 = vmul.f32 %v2047, %v2128
    %v2133 = vmul.f32 %v2048, %v2129
    %v2134 = vmul.f32 %v2049, %v2130
    %v2135 = vmul.f32 %v2050, %v2131
    %v2140 = vcombine.low %v2132, %v2133
    %v2141 = vcombine.low %v2134, %v2135
    %v2143 = vunpack.c.l.s4 1966171168
    %v2144 = vunpack.c.0.s8 %v2143
    %v2145 = vlaneseq
    %v2146 = vshrl.u32 %v2145, 7
    %v2147 = vsub.s32 %v2144, %v2146
    %v2148 = vrot.slane %v2140, %v2147
    %v2150 = vunpack.c.l.s4 1966171168
    %v2151 = vunpack.c.0.s8 %v2150
    %v2152 = vlaneseq
    %v2153 = vshrl.u32 %v2152, 7
    %v2154 = vsub.s32 %v2151, %v2153
    %v2155 = vrot.slane %v2141, %v2154
    %v2156 = vcombine.low %v2148, %v2155
    %v2158 = vunpack.c.l.s4 1966171168
    %v2159 = vunpack.c.0.s8 %v2158
    %v2160 = vlaneseq
    %v2161 = vshrl.u32 %v2160, 7
    %v2162 = vsub.s32 %v2159, %v2161
    %v2163 = vrot.slane %v2156, %v2162
    %v2165 = vsub.f32 %v2018, %v2163
    %v2166 = vlaneseq
    %v2167 = vshrl.u32 %v2166, 7
    %v2168 = vsub.s32 0, %v2167
    %v2169 = vrot.slane %v2128, %v2168
    %v2170 = vlaneseq
    %v2171 = vshrl.u32 %v2170, 7
    %v2172 = vsub.s32 0, %v2171
    %v2173 = vrot.slane %v2129, %v2172
    %v2174 = vlaneseq
    %v2175 = vshrl.u32 %v2174, 7
    %v2176 = vsub.s32 0, %v2175
    %v2177 = vrot.slane %v2130, %v2176
    %v2178 = vlaneseq
    %v2179 = vshrl.u32 %v2178, 7
    %v2180 = vsub.s32 0, %v2179
    %v2181 = vrot.slane %v2131, %v2180
    %v2182 = vmul.f32 %v1837, %v2169
    %v2183 = vmul.f32 %v1839, %v2173
    %v2184 = vmul.f32 %v2009, %v2177
    %v2185 = vmul.f32 %v2011, %v2181
    %v2186 = vmul.f32 %v1841, %v2169
    %v2187 = vmul.f32 %v1843, %v2173
    %v2188 = vmul.f32 %v2013, %v2177
    %v2189 = vmul.f32 %v2015, %v2181
    %v2191 = vlaneseq
    %v2192 = vshrl.u32 %v2191, 7
    %v2193 = vsub.s32 0, %v2192
    %v2194 = vrot.slane %v2165, %v2193
    %v2195 = vlaneseq
    %v2196 = vshrl.u32 %v2195, 7
    %v2197 = vsub.s32 1, %v2196
    %v2198 = vrot.slane %v2165, %v2197
    %v2199 = vlaneseq
    %v2200 = vshrl.u32 %v2199, 7
    %v2201 = vsub.s32 2, %v2200
    %v2202 = vrot.slane %v2165, %v2201
    %v2203 = vlaneseq
    %v2204 = vshrl.u32 %v2203, 7
    %v2205 = vsub.s32 3, %v2204
    %v2206 = vrot.slane %v2165, %v2205
    %v2211 = vadd.f32 %v2182, %v2194
    %v2212 = vadd.f32 %v2183, %v2198
    %v2213 = vadd.f32 %v2184, %v2202
    %v2214 = vadd.f32 %v2185, %v2206
    %v2215 = vadd.f32 %v2186, %v2194
    %v2216 = vadd.f32 %v2187, %v2198
    %v2217 = vadd.f32 %v2188, %v2202
    %v2218 = vadd.f32 %v2189, %v2206
    %v2219 = vmul.f32 %v2211, 0.2
    %v2220 = vmul.f32 %v2212, 0.2
    %v2221 = vmul.f32 %v2213, 0.2
    %v2222 = vmul.f32 %v2214, 0.2
    %v2223 = vmul.f32 %v2215, 0.2
    %v2224 = vmul.f32 %v2216, 0.2
    %v2225 = vmul.f32 %v2217, 0.2
    %v2226 = vmul.f32 %v2218, 0.2
    %v2227 = vmax.f32 %v2211, %v2219
    %v2228 = vmax.f32 %v2212, %v2220
    %v2229 = vmax.f32 %v2213, %v2221
    %v2230 = vmax.f32 %v2214, %v2222
    %v2231 = vmax.f32 %v2215, %v2223
    %v2232 = vmax.f32 %v2216, %v2224
    %v2233 = vmax.f32 %v2217, %v2225
    %v2234 = vmax.f32 %v2218, %v2226
    %v2235 = vpack.c.bf16 %v2231, %v2227
    %v2236 = vpack.c.bf16 %v2232, %v2228
    %v2237 = vpack.c.bf16 %v2233, %v2229
    %v2238 = vpack.c.bf16 %v2234, %v2230
    %v2239 = vld [vmem:[#allocation7] sm:$0xff]
    %v2240 = vld [vmem:[#allocation7 + $0x8] sm:$0xff]
    %v2241 = vld [vmem:[#allocation7 + $0x10] sm:$0xff]
    %v2242 = vld [vmem:[#allocation7 + $0x18] sm:$0xff]
    %v2243 = vld [vmem:[#allocation7 + $0x20] sm:$0xff]
    %v2244 = vld [vmem:[#allocation7 + $0x28] sm:$0xff]
    %v2245 = vld [vmem:[#allocation7 + $0x30] sm:$0xff]
    %v2246 = vld [vmem:[#allocation7 + $0x38] sm:$0xff]
    %v2247 = vld [vmem:[#allocation7 + $0x40] sm:$0xff]
    %v2248 = vld [vmem:[#allocation7 + $0x48] sm:$0xff]
    %v2249 = vld [vmem:[#allocation7 + $0x50] sm:$0xff]
    %v2250 = vld [vmem:[#allocation7 + $0x58] sm:$0xff]
    %v2251 = vld [vmem:[#allocation7 + $0x60] sm:$0xff]
    %v2252 = vld [vmem:[#allocation7 + $0x68] sm:$0xff]
    %v2253 = vld [vmem:[#allocation7 + $0x70] sm:$0xff]
    %v2254 = vld [vmem:[#allocation7 + $0x78] sm:$0xff]
    %v2255 = vld [vmem:[#allocation7 + $0x80] sm:$0xff]
    %v2256 = vld [vmem:[#allocation7 + $0x88] sm:$0xff]
    %v2257 = vld [vmem:[#allocation7 + $0x90] sm:$0xff]
    %v2258 = vld [vmem:[#allocation7 + $0x98] sm:$0xff]
    %v2259 = vld [vmem:[#allocation7 + $0xa0] sm:$0xff]
    %v2260 = vld [vmem:[#allocation7 + $0xa8] sm:$0xff]
    %v2261 = vld [vmem:[#allocation7 + $0xb0] sm:$0xff]
    %v2262 = vld [vmem:[#allocation7 + $0xb8] sm:$0xff]
    %v2263 = vld [vmem:[#allocation7 + $0xc0] sm:$0xff]
    %v2264 = vld [vmem:[#allocation7 + $0xc8] sm:$0xff]
    %v2265 = vld [vmem:[#allocation7 + $0xd0] sm:$0xff]
    %v2266 = vld [vmem:[#allocation7 + $0xd8] sm:$0xff]
    %v2267 = vld [vmem:[#allocation7 + $0xe0] sm:$0xff]
    %v2268 = vld [vmem:[#allocation7 + $0xe8] sm:$0xff]
    %v2269 = vld [vmem:[#allocation7 + $0xf0] sm:$0xff]
    %v2270 = vld [vmem:[#allocation7 + $0xf8] sm:$0xff]
    %v2271 = vld [vmem:[#allocation7 + $0x100] sm:$0xff]
    %v2272 = vld [vmem:[#allocation7 + $0x108] sm:$0xff]
    %v2273 = vld [vmem:[#allocation7 + $0x110] sm:$0xff]
    %v2274 = vld [vmem:[#allocation7 + $0x118] sm:$0xff]
    %v2275 = vld [vmem:[#allocation7 + $0x120] sm:$0xff]
    %v2276 = vld [vmem:[#allocation7 + $0x128] sm:$0xff]
    %v2277 = vld [vmem:[#allocation7 + $0x130] sm:$0xff]
    %v2278 = vld [vmem:[#allocation7 + $0x138] sm:$0xff]
    %v2279 = vld [vmem:[#allocation7 + $0x140] sm:$0xff]
    %v2280 = vld [vmem:[#allocation7 + $0x148] sm:$0xff]
    %v2281 = vld [vmem:[#allocation7 + $0x150] sm:$0xff]
    %v2282 = vld [vmem:[#allocation7 + $0x158] sm:$0xff]
    %v2283 = vld [vmem:[#allocation7 + $0x160] sm:$0xff]
    %v2284 = vld [vmem:[#allocation7 + $0x168] sm:$0xff]
    %v2285 = vld [vmem:[#allocation7 + $0x170] sm:$0xff]
    %v2286 = vld [vmem:[#allocation7 + $0x178] sm:$0xff]
    %v2287 = vld [vmem:[#allocation7 + $0x180] sm:$0xff]
    %v2288 = vld [vmem:[#allocation7 + $0x188] sm:$0xff]
    %v2289 = vld [vmem:[#allocation7 + $0x190] sm:$0xff]
    %v2290 = vld [vmem:[#allocation7 + $0x198] sm:$0xff]
    %v2291 = vld [vmem:[#allocation7 + $0x1a0] sm:$0xff]
    %v2292 = vld [vmem:[#allocation7 + $0x1a8] sm:$0xff]
    %v2293 = vld [vmem:[#allocation7 + $0x1b0] sm:$0xff]
    %v2294 = vld [vmem:[#allocation7 + $0x1b8] sm:$0xff]
    %v2295 = vld [vmem:[#allocation7 + $0x1c0] sm:$0xff]
    %v2296 = vld [vmem:[#allocation7 + $0x1c8] sm:$0xff]
    %v2297 = vld [vmem:[#allocation7 + $0x1d0] sm:$0xff]
    %v2298 = vld [vmem:[#allocation7 + $0x1d8] sm:$0xff]
    %v2299 = vld [vmem:[#allocation7 + $0x1e0] sm:$0xff]
    %v2300 = vld [vmem:[#allocation7 + $0x1e8] sm:$0xff]
    %v2301 = vld [vmem:[#allocation7 + $0x1f0] sm:$0xff]
    %v2302 = vld [vmem:[#allocation7 + $0x1f8] sm:$0xff]
    %v2367 = vunpack.c.l.b16 %v2239
    %v2368 = vunpack.c.h.b16 %v2239
    %v2369 = vunpack.c.l.b16 %v2240
    %v2370 = vunpack.c.h.b16 %v2240
    %v2371 = vunpack.c.l.b16 %v2241
    %v2372 = vunpack.c.h.b16 %v2241
    %v2373 = vunpack.c.l.b16 %v2242
    %v2374 = vunpack.c.h.b16 %v2242
    %v2375 = vunpack.c.l.b16 %v2243
    %v2376 = vunpack.c.h.b16 %v2243
    %v2377 = vunpack.c.l.b16 %v2244
    %v2378 = vunpack.c.h.b16 %v2244
    %v2379 = vunpack.c.l.b16 %v2245
    %v2380 = vunpack.c.h.b16 %v2245
    %v2381 = vunpack.c.l.b16 %v2246
    %v2382 = vunpack.c.h.b16 %v2246
    %v2383 = vunpack.c.l.b16 %v2247
    %v2384 = vunpack.c.h.b16 %v2247
    %v2385 = vunpack.c.l.b16 %v2248
    %v2386 = vunpack.c.h.b16 %v2248
    %v2387 = vunpack.c.l.b16 %v2249
    %v2388 = vunpack.c.h.b16 %v2249
    %v2389 = vunpack.c.l.b16 %v2250
    %v2390 = vunpack.c.h.b16 %v2250
    %v2391 = vunpack.c.l.b16 %v2251
    %v2392 = vunpack.c.h.b16 %v2251
    %v2393 = vunpack.c.l.b16 %v2252
    %v2394 = vunpack.c.h.b16 %v2252
    %v2395 = vunpack.c.l.b16 %v2253
    %v2396 = vunpack.c.h.b16 %v2253
    %v2397 = vunpack.c.l.b16 %v2254
    %v2398 = vunpack.c.h.b16 %v2254
    %v2399 = vunpack.c.l.b16 %v2255
    %v2400 = vunpack.c.h.b16 %v2255
    %v2401 = vunpack.c.l.b16 %v2256
    %v2402 = vunpack.c.h.b16 %v2256
    %v2403 = vunpack.c.l.b16 %v2257
    %v2404 = vunpack.c.h.b16 %v2257
    %v2405 = vunpack.c.l.b16 %v2258
    %v2406 = vunpack.c.h.b16 %v2258
    %v2407 = vunpack.c.l.b16 %v2259
    %v2408 = vunpack.c.h.b16 %v2259
    %v2409 = vunpack.c.l.b16 %v2260
    %v2410 = vunpack.c.h.b16 %v2260
    %v2411 = vunpack.c.l.b16 %v2261
    %v2412 = vunpack.c.h.b16 %v2261
    %v2413 = vunpack.c.l.b16 %v2262
    %v2414 = vunpack.c.h.b16 %v2262
    %v2415 = vunpack.c.l.b16 %v2263
    %v2416 = vunpack.c.h.b16 %v2263
    %v2417 = vunpack.c.l.b16 %v2264
    %v2418 = vunpack.c.h.b16 %v2264
    %v2419 = vunpack.c.l.b16 %v2265
    %v2420 = vunpack.c.h.b16 %v2265
    %v2421 = vunpack.c.l.b16 %v2266
    %v2422 = vunpack.c.h.b16 %v2266
    %v2423 = vunpack.c.l.b16 %v2267
    %v2424 = vunpack.c.h.b16 %v2267
    %v2425 = vunpack.c.l.b16 %v2268
    %v2426 = vunpack.c.h.b16 %v2268
    %v2427 = vunpack.c.l.b16 %v2269
    %v2428 = vunpack.c.h.b16 %v2269
    %v2429 = vunpack.c.l.b16 %v2270
    %v2430 = vunpack.c.h.b16 %v2270
    %v2431 = vunpack.c.l.b16 %v2271
    %v2432 = vunpack.c.h.b16 %v2271
    %v2433 = vunpack.c.l.b16 %v2272
    %v2434 = vunpack.c.h.b16 %v2272
    %v2435 = vunpack.c.l.b16 %v2273
    %v2436 = vunpack.c.h.b16 %v2273
    %v2437 = vunpack.c.l.b16 %v2274
    %v2438 = vunpack.c.h.b16 %v2274
    %v2439 = vunpack.c.l.b16 %v2275
    %v2440 = vunpack.c.h.b16 %v2275
    %v2441 = vunpack.c.l.b16 %v2276
    %v2442 = vunpack.c.h.b16 %v2276
    %v2443 = vunpack.c.l.b16 %v2277
    %v2444 = vunpack.c.h.b16 %v2277
    %v2445 = vunpack.c.l.b16 %v2278
    %v2446 = vunpack.c.h.b16 %v2278
    %v2447 = vunpack.c.l.b16 %v2279
    %v2448 = vunpack.c.h.b16 %v2279
    %v2449 = vunpack.c.l.b16 %v2280
    %v2450 = vunpack.c.h.b16 %v2280
    %v2451 = vunpack.c.l.b16 %v2281
    %v2452 = vunpack.c.h.b16 %v2281
    %v2453 = vunpack.c.l.b16 %v2282
    %v2454 = vunpack.c.h.b16 %v2282
    %v2455 = vunpack.c.l.b16 %v2283
    %v2456 = vunpack.c.h.b16 %v2283
    %v2457 = vunpack.c.l.b16 %v2284
    %v2458 = vunpack.c.h.b16 %v2284
    %v2459 = vunpack.c.l.b16 %v2285
    %v2460 = vunpack.c.h.b16 %v2285
    %v2461 = vunpack.c.l.b16 %v2286
    %v2462 = vunpack.c.h.b16 %v2286
    %v2463 = vunpack.c.l.b16 %v2287
    %v2464 = vunpack.c.h.b16 %v2287
    %v2465 = vunpack.c.l.b16 %v2288
    %v2466 = vunpack.c.h.b16 %v2288
    %v2467 = vunpack.c.l.b16 %v2289
    %v2468 = vunpack.c.h.b16 %v2289
    %v2469 = vunpack.c.l.b16 %v2290
    %v2470 = vunpack.c.h.b16 %v2290
    %v2471 = vunpack.c.l.b16 %v2291
    %v2472 = vunpack.c.h.b16 %v2291
    %v2473 = vunpack.c.l.b16 %v2292
    %v2474 = vunpack.c.h.b16 %v2292
    %v2475 = vunpack.c.l.b16 %v2293
    %v2476 = vunpack.c.h.b16 %v2293
    %v2477 = vunpack.c.l.b16 %v2294
    %v2478 = vunpack.c.h.b16 %v2294
    %v2479 = vunpack.c.l.b16 %v2295
    %v2480 = vunpack.c.h.b16 %v2295
    %v2481 = vunpack.c.l.b16 %v2296
    %v2482 = vunpack.c.h.b16 %v2296
    %v2483 = vunpack.c.l.b16 %v2297
    %v2484 = vunpack.c.h.b16 %v2297
    %v2485 = vunpack.c.l.b16 %v2298
    %v2486 = vunpack.c.h.b16 %v2298
    %v2487 = vunpack.c.l.b16 %v2299
    %v2488 = vunpack.c.h.b16 %v2299
    %v2489 = vunpack.c.l.b16 %v2300
    %v2490 = vunpack.c.h.b16 %v2300
    %v2491 = vunpack.c.l.b16 %v2301
    %v2492 = vunpack.c.h.b16 %v2301
    %v2493 = vunpack.c.l.b16 %v2302
    %v2494 = vunpack.c.h.b16 %v2302
    %v2495 = vpack.c.b16 %v2369, %v2367
    %v2496 = vpack.c.b16 %v2370, %v2368
    %v2497 = vpack.c.b16 %v2373, %v2371
    %v2498 = vpack.c.b16 %v2374, %v2372
    %v2499 = vpack.c.b16 %v2377, %v2375
    %v2500 = vpack.c.b16 %v2378, %v2376
    %v2501 = vpack.c.b16 %v2381, %v2379
    %v2502 = vpack.c.b16 %v2382, %v2380
    %v2503 = vpack.c.b16 %v2385, %v2383
    %v2504 = vpack.c.b16 %v2386, %v2384
    %v2505 = vpack.c.b16 %v2389, %v2387
    %v2506 = vpack.c.b16 %v2390, %v2388
    %v2507 = vpack.c.b16 %v2393, %v2391
    %v2508 = vpack.c.b16 %v2394, %v2392
    %v2509 = vpack.c.b16 %v2397, %v2395
    %v2510 = vpack.c.b16 %v2398, %v2396
    %v2511 = vpack.c.b16 %v2401, %v2399
    %v2512 = vpack.c.b16 %v2402, %v2400
    %v2513 = vpack.c.b16 %v2405, %v2403
    %v2514 = vpack.c.b16 %v2406, %v2404
    %v2515 = vpack.c.b16 %v2409, %v2407
    %v2516 = vpack.c.b16 %v2410, %v2408
    %v2517 = vpack.c.b16 %v2413, %v2411
    %v2518 = vpack.c.b16 %v2414, %v2412
    %v2519 = vpack.c.b16 %v2417, %v2415
    %v2520 = vpack.c.b16 %v2418, %v2416
    %v2521 = vpack.c.b16 %v2421, %v2419
    %v2522 = vpack.c.b16 %v2422, %v2420
    %v2523 = vpack.c.b16 %v2425, %v2423
    %v2524 = vpack.c.b16 %v2426, %v2424
    %v2525 = vpack.c.b16 %v2429, %v2427
    %v2526 = vpack.c.b16 %v2430, %v2428
    %v2527 = vpack.c.b16 %v2433, %v2431
    %v2528 = vpack.c.b16 %v2434, %v2432
    %v2529 = vpack.c.b16 %v2437, %v2435
    %v2530 = vpack.c.b16 %v2438, %v2436
    %v2531 = vpack.c.b16 %v2441, %v2439
    %v2532 = vpack.c.b16 %v2442, %v2440
    %v2533 = vpack.c.b16 %v2445, %v2443
    %v2534 = vpack.c.b16 %v2446, %v2444
    %v2535 = vpack.c.b16 %v2449, %v2447
    %v2536 = vpack.c.b16 %v2450, %v2448
    %v2537 = vpack.c.b16 %v2453, %v2451
    %v2538 = vpack.c.b16 %v2454, %v2452
    %v2539 = vpack.c.b16 %v2457, %v2455
    %v2540 = vpack.c.b16 %v2458, %v2456
    %v2541 = vpack.c.b16 %v2461, %v2459
    %v2542 = vpack.c.b16 %v2462, %v2460
    %v2543 = vpack.c.b16 %v2465, %v2463
    %v2544 = vpack.c.b16 %v2466, %v2464
    %v2545 = vpack.c.b16 %v2469, %v2467
    %v2546 = vpack.c.b16 %v2470, %v2468
    %v2547 = vpack.c.b16 %v2473, %v2471
    %v2548 = vpack.c.b16 %v2474, %v2472
    %v2549 = vpack.c.b16 %v2477, %v2475
    %v2550 = vpack.c.b16 %v2478, %v2476
    %v2551 = vpack.c.b16 %v2481, %v2479
    %v2552 = vpack.c.b16 %v2482, %v2480
    %v2553 = vpack.c.b16 %v2485, %v2483
    %v2554 = vpack.c.b16 %v2486, %v2484
    %v2555 = vpack.c.b16 %v2489, %v2487
    %v2556 = vpack.c.b16 %v2490, %v2488
    %v2557 = vpack.c.b16 %v2493, %v2491
    %v2558 = vpack.c.b16 %v2494, %v2492
    %2623 = vmatprep.subr.bf16.mxu0 %v2496
    %2624 = vmatpush1.bf16.msra.mxu0 %v2495
    %2625 = vmatprep.subr.bf16.mxu0 %v2498
    %2626 = vmatpush1.bf16.msra.mxu0 %v2497
    %2627 = vmatprep.subr.bf16.mxu0 %v2500
    %2628 = vmatpush1.bf16.msra.mxu0 %v2499
    %2629 = vmatprep.subr.bf16.mxu0 %v2502
    %2630 = vmatpush1.bf16.msra.mxu0 %v2501
    %2631 = vmatprep.subr.bf16.mxu0 %v2504
    %2632 = vmatpush1.bf16.msra.mxu0 %v2503
    %2633 = vmatprep.subr.bf16.mxu0 %v2506
    %2634 = vmatpush1.bf16.msra.mxu0 %v2505
    %2635 = vmatprep.subr.bf16.mxu0 %v2508
    %2636 = vmatpush1.bf16.msra.mxu0 %v2507
    %2637 = vmatprep.subr.bf16.mxu0 %v2510
    %2638 = vmatpush1.bf16.msra.mxu0 %v2509
    %2639 = vmatprep.subr.bf16.mxu0 %v2512
    %2640 = vmatpush1.bf16.msra.mxu0 %v2511
    %2641 = vmatprep.subr.bf16.mxu0 %v2514
    %2642 = vmatpush1.bf16.msra.mxu0 %v2513
    %2643 = vmatprep.subr.bf16.mxu0 %v2516
    %2644 = vmatpush1.bf16.msra.mxu0 %v2515
    %2645 = vmatprep.subr.bf16.mxu0 %v2518
    %2646 = vmatpush1.bf16.msra.mxu0 %v2517
    %2647 = vmatprep.subr.bf16.mxu0 %v2520
    %2648 = vmatpush1.bf16.msra.mxu0 %v2519
    %2649 = vmatprep.subr.bf16.mxu0 %v2522
    %2650 = vmatpush1.bf16.msra.mxu0 %v2521
    %2651 = vmatprep.subr.bf16.mxu0 %v2524
    %2652 = vmatpush1.bf16.msra.mxu0 %v2523
    %2653 = vmatprep.subr.bf16.mxu0 %v2526
    %2654 = vmatpush1.bf16.msra.mxu0 %v2525
    %2655 = vmatprep.mubr.bf16.mxu0 %v2236
    %2656 = vmatmul.mubr.bf16.gmra.mrb[0].mxu0 %v2235
    %v2657 = vpop.f32.mrb[0].mxu0
    %v2658 = vadd.f32 0.0, %v2657
    %v2659 = vpop.f32.mrb[0].mxu0
    %v2660 = vadd.f32 0.0, %v2659
    %v2661 = vpop.f32.mrb[0].mxu0
    %v2662 = vadd.f32 0.0, %v2661
    %v2663 = vpop.f32.mrb[0].mxu0
    %v2664 = vadd.f32 0.0, %v2663
    %2665 = vdwg.mxu0
    %2666 = vmatprep.subr.bf16.mxu0 %v2528
    %2667 = vmatpush1.bf16.msra.mxu0 %v2527
    %2668 = vmatprep.subr.bf16.mxu0 %v2530
    %2669 = vmatpush1.bf16.msra.mxu0 %v2529
    %2670 = vmatprep.subr.bf16.mxu0 %v2532
    %2671 = vmatpush1.bf16.msra.mxu0 %v2531
    %2672 = vmatprep.subr.bf16.mxu0 %v2534
    %2673 = vmatpush1.bf16.msra.mxu0 %v2533
    %2674 = vmatprep.subr.bf16.mxu0 %v2536
    %2675 = vmatpush1.bf16.msra.mxu0 %v2535
    %2676 = vmatprep.subr.bf16.mxu0 %v2538
    %2677 = vmatpush1.bf16.msra.mxu0 %v2537
    %2678 = vmatprep.subr.bf16.mxu0 %v2540
    %2679 = vmatpush1.bf16.msra.mxu0 %v2539
    %2680 = vmatprep.subr.bf16.mxu0 %v2542
    %2681 = vmatpush1.bf16.msra.mxu0 %v2541
    %2682 = vmatprep.subr.bf16.mxu0 %v2544
    %2683 = vmatpush1.bf16.msra.mxu0 %v2543
    %2684 = vmatprep.subr.bf16.mxu0 %v2546
    %2685 = vmatpush1.bf16.msra.mxu0 %v2545
    %2686 = vmatprep.subr.bf16.mxu0 %v2548
    %2687 = vmatpush1.bf16.msra.mxu0 %v2547
    %2688 = vmatprep.subr.bf16.mxu0 %v2550
    %2689 = vmatpush1.bf16.msra.mxu0 %v2549
    %2690 = vmatprep.subr.bf16.mxu0 %v2552
    %2691 = vmatpush1.bf16.msra.mxu0 %v2551
    %2692 = vmatprep.subr.bf16.mxu0 %v2554
    %2693 = vmatpush1.bf16.msra.mxu0 %v2553
    %2694 = vmatprep.subr.bf16.mxu0 %v2556
    %2695 = vmatpush1.bf16.msra.mxu0 %v2555
    %2696 = vmatprep.subr.bf16.mxu0 %v2558
    %2697 = vmatpush1.bf16.msra.mxu0 %v2557
    %2698 = vmatprep.mubr.bf16.mxu0 %v2238
    %2699 = vmatmul.mubr.bf16.gmra.mrb[0].mxu0 %v2237
    %v2700 = vpop.f32.mrb[0].mxu0
    %v2701 = vadd.f32 %v2658, %v2700
    %v2702 = vpop.f32.mrb[0].mxu0
    %v2703 = vadd.f32 %v2660, %v2702
    %v2704 = vpop.f32.mrb[0].mxu0
    %v2705 = vadd.f32 %v2662, %v2704
    %v2706 = vpop.f32.mrb[0].mxu0
    %v2707 = vadd.f32 %v2664, %v2706
    %2708 = vdwg.mxu0
    %v2709 = vld [vmem:[%s5] sm:$0x3]
    %v2710 = vld [vmem:[%s6] sm:$0x3]
    %v2711 = vadd.f32 %v2701, %v2705
    %v2712 = vrot.slane %v2711, 4
    %v2713 = vadd.f32 %v2711, %v2712
    %v2714 = vrot.slane %v2713, 2
    %v2715 = vadd.f32 %v2713, %v2714
    %v2716 = vrot.slane %v2715, 1
    %v2717 = vadd.f32 %v2715, %v2716
    %v2718 = vadd.f32 %v2703, %v2707
    %v2719 = vrot.slane %v2718, 4
    %v2720 = vadd.f32 %v2718, %v2719
    %v2721 = vrot.slane %v2720, 2
    %v2722 = vadd.f32 %v2720, %v2721
    %v2723 = vrot.slane %v2722, 1
    %v2724 = vadd.f32 %v2722, %v2723
    %v2725 = vmul.f32 %v2717, 0.0625
    %v2726 = vmul.f32 %v2724, 0.0625
    %v2727 = vmul.f32 %v2701, %v2701
    %v2728 = vmul.f32 %v2703, %v2703
    %v2729 = vmul.f32 %v2705, %v2705
    %v2730 = vmul.f32 %v2707, %v2707
    %v2731 = vadd.f32 %v2727, %v2729
    %v2732 = vrot.slane %v2731, 4
    %v2733 = vadd.f32 %v2731, %v2732
    %v2734 = vrot.slane %v2733, 2
    %v2735 = vadd.f32 %v2733, %v2734
    %v2736 = vrot.slane %v2735, 1
    %v2737 = vadd.f32 %v2735, %v2736
    %v2738 = vadd.f32 %v2728, %v2730
    %v2739 = vrot.slane %v2738, 4
    %v2740 = vadd.f32 %v2738, %v2739
    %v2741 = vrot.slane %v2740, 2
    %v2742 = vadd.f32 %v2740, %v2741
    %v2743 = vrot.slane %v2742, 1
    %v2744 = vadd.f32 %v2742, %v2743
    %v2745 = vmul.f32 %v2737, 0.0625
    %v2746 = vmul.f32 %v2744, 0.0625
    %v2747 = vmul.f32 %v2725, %v2725
    %v2748 = vmul.f32 %v2726, %v2726
    %v2749 = vsub.f32 %v2745, %v2747
    %v2750 = vsub.f32 %v2746, %v2748
    %v2751 = vadd.f32 %v2749, 1e-05
    %v2752 = vadd.f32 %v2750, 1e-05
    %v2753 = vrsqrt.pop %v2751
    %v2754 = vrsqrt.pop %v2752
    %v2756 = vlaneseq
    %v2757 = vshrl.u32 %v2756, 7
    %v2758 = vsub.s32 0, %v2757
    %v2759 = vrot.slane %v2709, %v2758
    %v2760 = vlaneseq
    %v2761 = vshrl.u32 %v2760, 7
    %v2762 = vsub.s32 1, %v2761
    %v2763 = vrot.slane %v2709, %v2762
    %v2766 = vmul.f32 %v2753, %v2759
    %v2767 = vmul.f32 %v2754, %v2763
    %v2768 = vmul.f32 %v2725, %v2766
    %v2769 = vmul.f32 %v2726, %v2767
    %v2772 = vcombine.low %v2768, %v2769
    %v2774 = vunpack.c.l.s4 1966171168
    %v2775 = vunpack.c.0.s8 %v2774
    %v2776 = vlaneseq
    %v2777 = vshrl.u32 %v2776, 7
    %v2778 = vsub.s32 %v2775, %v2777
    %v2779 = vrot.slane %v2772, %v2778
    %v2781 = vunpack.c.l.s4 1966171168
    %v2782 = vunpack.c.0.s8 %v2781
    %v2783 = vlaneseq
    %v2784 = vshrl.u32 %v2783, 7
    %v2785 = vsub.s32 %v2782, %v2784
    %v2786 = vrot.slane %v2779, %v2785
    %v2788 = vsub.f32 %v2710, %v2786
    %v2789 = vlaneseq
    %v2790 = vshrl.u32 %v2789, 7
    %v2791 = vsub.s32 0, %v2790
    %v2792 = vrot.slane %v2766, %v2791
    %v2793 = vlaneseq
    %v2794 = vshrl.u32 %v2793, 7
    %v2795 = vsub.s32 0, %v2794
    %v2796 = vrot.slane %v2767, %v2795
    %v2797 = vmul.f32 %v2701, %v2792
    %v2798 = vmul.f32 %v2703, %v2796
    %v2799 = vmul.f32 %v2705, %v2792
    %v2800 = vmul.f32 %v2707, %v2796
    %v2802 = vlaneseq
    %v2803 = vshrl.u32 %v2802, 7
    %v2804 = vsub.s32 0, %v2803
    %v2805 = vrot.slane %v2788, %v2804
    %v2806 = vlaneseq
    %v2807 = vshrl.u32 %v2806, 7
    %v2808 = vsub.s32 1, %v2807
    %v2809 = vrot.slane %v2788, %v2808
    %v2812 = vadd.f32 %v2797, %v2805
    %v2813 = vadd.f32 %v2798, %v2809
    %v2814 = vadd.f32 %v2799, %v2805
    %v2815 = vadd.f32 %v2800, %v2809
    %v2816 = vmul.f32 %v2812, 0.2
    %v2817 = vmul.f32 %v2813, 0.2
    %v2818 = vmul.f32 %v2814, 0.2
    %v2819 = vmul.f32 %v2815, 0.2
    %v2820 = vmax.f32 %v2812, %v2816
    %v2821 = vmax.f32 %v2813, %v2817
    %v2822 = vmax.f32 %v2814, %v2818
    %v2823 = vmax.f32 %v2815, %v2819
    %v2824 = vpack.c.bf16 %v2822, %v2820
    %v2825 = vpack.c.bf16 %v2823, %v2821
    %v2826 = vld [vmem:[#allocation8] sm:$0xf]
    %v2827 = vld [vmem:[#allocation8 + $0x4] sm:$0xf]
    %v2828 = vld [vmem:[#allocation8 + $0x8] sm:$0xf]
    %v2829 = vld [vmem:[#allocation8 + $0xc] sm:$0xf]
    %v2830 = vld [vmem:[#allocation8 + $0x10] sm:$0xf]
    %v2831 = vld [vmem:[#allocation8 + $0x14] sm:$0xf]
    %v2832 = vld [vmem:[#allocation8 + $0x18] sm:$0xf]
    %v2833 = vld [vmem:[#allocation8 + $0x1c] sm:$0xf]
    %v2834 = vld [vmem:[#allocation8 + $0x20] sm:$0xf]
    %v2835 = vld [vmem:[#allocation8 + $0x24] sm:$0xf]
    %v2836 = vld [vmem:[#allocation8 + $0x28] sm:$0xf]
    %v2837 = vld [vmem:[#allocation8 + $0x2c] sm:$0xf]
    %v2838 = vld [vmem:[#allocation8 + $0x30] sm:$0xf]
    %v2839 = vld [vmem:[#allocation8 + $0x34] sm:$0xf]
    %v2840 = vld [vmem:[#allocation8 + $0x38] sm:$0xf]
    %v2841 = vld [vmem:[#allocation8 + $0x3c] sm:$0xf]
    %v2842 = vld [vmem:[#allocation8 + $0x40] sm:$0xf]
    %v2843 = vld [vmem:[#allocation8 + $0x44] sm:$0xf]
    %v2844 = vld [vmem:[#allocation8 + $0x48] sm:$0xf]
    %v2845 = vld [vmem:[#allocation8 + $0x4c] sm:$0xf]
    %v2846 = vld [vmem:[#allocation8 + $0x50] sm:$0xf]
    %v2847 = vld [vmem:[#allocation8 + $0x54] sm:$0xf]
    %v2848 = vld [vmem:[#allocation8 + $0x58] sm:$0xf]
    %v2849 = vld [vmem:[#allocation8 + $0x5c] sm:$0xf]
    %v2850 = vld [vmem:[#allocation8 + $0x60] sm:$0xf]
    %v2851 = vld [vmem:[#allocation8 + $0x64] sm:$0xf]
    %v2852 = vld [vmem:[#allocation8 + $0x68] sm:$0xf]
    %v2853 = vld [vmem:[#allocation8 + $0x6c] sm:$0xf]
    %v2854 = vld [vmem:[#allocation8 + $0x70] sm:$0xf]
    %v2855 = vld [vmem:[#allocation8 + $0x74] sm:$0xf]
    %v2856 = vld [vmem:[#allocation8 + $0x78] sm:$0xf]
    %v2857 = vld [vmem:[#allocation8 + $0x7c] sm:$0xf]
    %v2858 = vld [vmem:[%s8] sm:$0x1]
    %v2860 = vlaneseq
    %v2861 = vshrl.u32 %v2860, 7
    %v2862 = vsub.s32 0, %v2861
    %v2863 = vrot.slane %v2858, %v2862
    %v2897 = vunpack.c.l.b16 %v2826
    %v2898 = vunpack.c.l.b16 %v2827
    %v2899 = vunpack.c.l.b16 %v2828
    %v2900 = vunpack.c.l.b16 %v2829
    %v2901 = vunpack.c.l.b16 %v2830
    %v2902 = vunpack.c.l.b16 %v2831
    %v2903 = vunpack.c.l.b16 %v2832
    %v2904 = vunpack.c.l.b16 %v2833
    %v2905 = vunpack.c.l.b16 %v2834
    %v2906 = vunpack.c.l.b16 %v2835
    %v2907 = vunpack.c.l.b16 %v2836
    %v2908 = vunpack.c.l.b16 %v2837
    %v2909 = vunpack.c.l.b16 %v2838
    %v2910 = vunpack.c.l.b16 %v2839
    %v2911 = vunpack.c.l.b16 %v2840
    %v2912 = vunpack.c.l.b16 %v2841
    %v2913 = vunpack.c.l.b16 %v2842
    %v2914 = vunpack.c.l.b16 %v2843
    %v2915 = vunpack.c.l.b16 %v2844
    %v2916 = vunpack.c.l.b16 %v2845
    %v2917 = vunpack.c.l.b16 %v2846
    %v2918 = vunpack.c.l.b16 %v2847
    %v2919 = vunpack.c.l.b16 %v2848
    %v2920 = vunpack.c.l.b16 %v2849
    %v2921 = vunpack.c.l.b16 %v2850
    %v2922 = vunpack.c.l.b16 %v2851
    %v2923 = vunpack.c.l.b16 %v2852
    %v2924 = vunpack.c.l.b16 %v2853
    %v2925 = vunpack.c.l.b16 %v2854
    %v2926 = vunpack.c.l.b16 %v2855
    %v2927 = vunpack.c.l.b16 %v2856
    %v2928 = vunpack.c.l.b16 %v2857
    %v2929 = vpack.c.b16 %v2898, %v2897
    %v2930 = vpack.c.b16 %v2900, %v2899
    %v2931 = vpack.c.b16 %v2902, %v2901
    %v2932 = vpack.c.b16 %v2904, %v2903
    %v2933 = vpack.c.b16 %v2906, %v2905
    %v2934 = vpack.c.b16 %v2908, %v2907
    %v2935 = vpack.c.b16 %v2910, %v2909
    %v2936 = vpack.c.b16 %v2912, %v2911
    %v2937 = vpack.c.b16 %v2914, %v2913
    %v2938 = vpack.c.b16 %v2916, %v2915
    %v2939 = vpack.c.b16 %v2918, %v2917
    %v2940 = vpack.c.b16 %v2920, %v2919
    %v2941 = vpack.c.b16 %v2922, %v2921
    %v2942 = vpack.c.b16 %v2924, %v2923
    %v2943 = vpack.c.b16 %v2926, %v2925
    %v2944 = vpack.c.b16 %v2928, %v2927
    %2961 = vmatprep.subr.bf16.mxu0 0
    %2962 = vmatpush1.bf16.msra.mxu0 %v2929
    %2963 = vmatprep.subr.bf16.mxu0 0
    %2964 = vmatpush1.bf16.msra.mxu0 %v2930
    %2965 = vmatprep.subr.bf16.mxu0 0
    %2966 = vmatpush1.bf16.msra.mxu0 %v2931
    %2967 = vmatprep.subr.bf16.mxu0 0
    %2968 = vmatpush1.bf16.msra.mxu0 %v2932
    %2969 = vmatprep.subr.bf16.mxu0 0
    %2970 = vmatpush1.bf16.msra.mxu0 %v2933
    %2971 = vmatprep.subr.bf16.mxu0 0
    %2972 = vmatpush1.bf16.msra.mxu0 %v2934
    %2973 = vmatprep.subr.bf16.mxu0 0
    %2974 = vmatpush1.bf16.msra.mxu0 %v2935
    %2975 = vmatprep.subr.bf16.mxu0 0
    %2976 = vmatpush1.bf16.msra.mxu0 %v2936
    %2977 = vmatprep.subr.bf16.mxu0 0
    %2978 = vmatpush1.bf16.msra.mxu0 %v2937
    %2979 = vmatprep.subr.bf16.mxu0 0
    %2980 = vmatpush1.bf16.msra.mxu0 %v2938
    %2981 = vmatprep.subr.bf16.mxu0 0
    %2982 = vmatpush1.bf16.msra.mxu0 %v2939
    %2983 = vmatprep.subr.bf16.mxu0 0
    %2984 = vmatpush1.bf16.msra.mxu0 %v2940
    %2985 = vmatprep.subr.bf16.mxu0 0
    %2986 = vmatpush1.bf16.msra.mxu0 %v2941
    %2987 = vmatprep.subr.bf16.mxu0 0
    %2988 = vmatpush1.bf16.msra.mxu0 %v2942
    %2989 = vmatprep.subr.bf16.mxu0 0
    %2990 = vmatpush1.bf16.msra.mxu0 %v2943
    %2991 = vmatprep.subr.bf16.mxu0 0
    %2992 = vmatpush1.bf16.msra.mxu0 %v2944
    %2993 = vmatprep.mubr.bf16.mxu0 %v2825
    %2994 = vmatmul.mubr.bf16.gmra.mrb[0].mxu0 %v2824
    %v2995 = vpop.f32.mrb[0].mxu0
    %v2996 = vadd.f32 %v2863, %v2995
    %v2997 = vpop.f32.mrb[0].mxu0
    %v2998 = vpop.f32.mrb[0].mxu0
    %v2999 = vadd.f32 %v2863, %v2998
    %v3000 = vpop.f32.mrb[0].mxu0
    %3001 = vdwg.mxu0
    %3002 = vst [vmem:[#allocation10] sm:$0xff] %v2996
    %3003 = vst [vmem:[#allocation10 + $0x8] sm:$0xff] %v2999
    // Predicated region
    $region54: #{tpu_custom_call.1} parent=1 // pred_check
      _
    $region55: #{tpu_custom_call.1} parent=1 // pred_check_branch
      %3005 = sbr.rel (0) target = $region57
    $region56: #{tpu_custom_call.1} parent=1 // pred_region
      %s3007 = ssub.s32 256, 256
      %3008 = vsyncadd [#allocation4], %s3007
      %s3009 = sshll.u32 [#allocation10], 4
      %s3010 = int_to_ptr.vmem [resolvable:$true] %s3009
      %3015 = dma.vmem_to_hbm [thread:$0]  %s3010, 256, %s9, [#allocation4], 128, 128, 8
    $region57: #{tpu_custom_call.1} parent=1 // pred_fallthru
      _
    // Predicated region
    $region58: #{tpu_custom_call.1} parent=1 // pred_check
      _
    $region59: #{tpu_custom_call.1} parent=1 // pred_check_branch
      %3017 = sbr.rel (0) target = $region61
    $region60: #{tpu_custom_call.1} parent=1 // pred_region
      %3018 = dma.done [#allocation4], 256
    $region61: #{tpu_custom_call.1} parent=1 // pred_fallthru
      _
    %3019 = vsyncpa [#allocation3], 1
    %3020 = vsyncpa [#allocation6], 1
    %3021 = vsyncpa [#allocation9], 1
    %3022 = vsyncpa [#allocation4], 1

</llo_original>
